<compile_context>
chip_gen: v6e
topology: v6e:2x2x1
jax: 0.10.0
libtpu: 0.0.40
codegen_flags: <defaults>
</compile_context>

<pallas_src>
import functools

import jax
import jax.numpy as jnp
from jax import lax
from jax.experimental import pallas as pl
from jax.experimental.pallas import tpu as pltpu


# ------------------------------ fused kernel -------------------------------- #

def _critic_fused_kernel(
    # per-block inputs
    obs_ref,            # (H*TB, W*C)  bf16: row-parity-split, (row, sample)-stacked
    act_ref,            # (TB, A)      f32
    # conv weights as banded matmul matrices (one per kernel row di)
    w1_ref, b1_ref,     # (3, W*C,  s1*F) bf16 (1/255 folded), (1, s1*F) f32
    w2_ref, b2_ref,     # (3, s1*F, s2*F), (1, s2*F)
    w3_ref, b3_ref,     # (3, s2*F, s3*F), (1, s3*F)
    w4_ref, b4_ref,     # (3, s3*F,    F), (1, F)
    # encoder head
    fcw_ref, fcb_ref,   # (F, D) bf16, (1, D) f32
    lng_ref, lnb_ref,   # (1, D) f32, (1, D) f32
    # fused double-Q head (Q1 | Q2 packed along lanes)
    qw1f_ref, qw1a_ref, qb1_ref,   # (D, 2Hq) bf16, (A, 2Hq) bf16, (1, 2Hq) f32
    qw2_ref, qb2_ref,              # (2Hq, 2Hq) bf16 block-diag, (1, 2Hq) f32
    qw3_ref, qb3_ref,              # (2Hq, 2)   bf16 block-diag, (1, 2)   f32
    # output
    out_ref,                       # (TB, 2) f32 -> [q1, q2]
    *, tb, spatials):
    f32, bf16 = jnp.float32, jnp.bfloat16
    s0, s1, s2, s3, s4 = spatials

    def dot(a, b):
        return jnp.dot(a, b, preferred_element_type=f32)   # bf16 x bf16 -> f32 acc

    # --- conv1: 3x3, stride 2, VALID, ReLU — three banded MXU dots.
    # Even input rows live at stacked rows [0, n_even*TB), odd rows after.
    # Tap di of output row io reads input row 2*io+di, hence:
    #   di=0 -> even rows 0..s1-1, di=1 -> odd rows 0..s1-1, di=2 -> even rows 1..s1,
    # each a contiguous sublane slice of width s1*TB.  The stride-2 column
    # pattern and the 1/255 scaling are folded into the banded weights.
    odd0 = ((s0 + 1) // 2) * tb
    acc = dot(obs_ref[0:s1 * tb, :], w1_ref[0])
    acc += dot(obs_ref[odd0:odd0 + s1 * tb, :], w1_ref[1])
    acc += dot(obs_ref[tb:tb + s1 * tb, :], w1_ref[2])
    h = jnp.maximum(acc + b1_ref[...], 0.0).astype(bf16)        # (s1*TB, s1*F)

    # --- conv2..4: 3x3, stride 1, VALID, ReLU.  Each layer's activation is a
    # single (rows*TB, width*F) slab, channel-minor on lanes, (row, sample) on
    # sublanes; tap di is a contiguous sublane slice.  No concatenates.
    def conv_s1(x, w_ref, b_ref, n_out):
        a = dot(x[0 * tb:(0 + n_out) * tb, :], w_ref[0])
        a += dot(x[1 * tb:(1 + n_out) * tb, :], w_ref[1])
        a += dot(x[2 * tb:(2 + n_out) * tb, :], w_ref[2])
        return jnp.maximum(a + b_ref[...], 0.0).astype(bf16)

    h = conv_s1(h, w2_ref, b2_ref, s2)                           # (s2*TB, s2*F)
    h = conv_s1(h, w3_ref, b3_ref, s3)                           # (s3*TB, s3*F)
    h = conv_s1(h, w4_ref, b4_ref, s4)                           # (TB, F)  (1x1 spatial)

    # --- encoder head: Linear -> LayerNorm(eps=1e-5, affine) -> tanh (f32 VPU/EUP).
    y = dot(h, fcw_ref[...]) + fcb_ref[...]                      # (TB, D) f32
    mu = jnp.mean(y, axis=-1, keepdims=True)
    var = jnp.mean(jnp.square(y - mu), axis=-1, keepdims=True)
    feat = jnp.tanh((y - mu) * lax.rsqrt(var + 1e-5) * lng_ref[...] + lnb_ref[...])

    # --- fused double-Q MLP: (Linear+ReLU) x2, Linear -> (TB, 2).
    # [feat, action] concat avoided by splitting the first-layer weights.
    a = act_ref[...].astype(bf16)
    hq = dot(feat.astype(bf16), qw1f_ref[...]) + dot(a, qw1a_ref[...]) + qb1_ref[...]
    hq = jnp.maximum(hq, 0.0).astype(bf16)
    hq = jnp.maximum(dot(hq, qw2_ref[...]) + qb2_ref[...], 0.0).astype(bf16)
    out_ref[...] = (dot(hq, qw3_ref[...]) + qb3_ref[...]).astype(out_ref.dtype)


# ------------------------------ JAX wrapper --------------------------------- #

def _band_matrices(w, win, stride, scale=1.0):
    """PyTorch conv weight (Cout, Cin, 3, 3), VALID conv with `stride`, acting on
    channel-minor rows (lane index = column*Cin + ci) ->
    3 banded matrices M[di] of shape (win*Cin, wout*Cout) such that
      out_row[io] = sum_di in_row[stride*io + di] @ M[di]
    with M[di][(stride*jo+dj)*Cin + ci, jo*Cout + co] = w[co, ci, di, dj]."""
    cout, cin = int(w.shape[0]), int(w.shape[1])
    wout = (win - 3) // stride + 1
    rows = jnp.arange(win)
    jo = jnp.arange(wout)
    mats = []
    for di in range(3):
        m = jnp.zeros((win, cin, wout, cout), jnp.float32)
        for dj in range(3):
            blk = w[:, :, di, dj].T * scale                              # (Cin, Cout)
            sel = (rows[:, None] == (stride * jo + dj)[None, :]).astype(jnp.float32)
            m = m + jnp.einsum('ij,ab->iajb', sel, blk)
        mats.append(m.reshape(win * cin, wout * cout))
    return jnp.stack(mats)                                               # (3, K, N)


def _pack_params(params, w_in, spatials):
    """Pack all weights once: bf16 MXU operands, banded conv matrices, tiled
    conv biases, and the Q1|Q2 lane-packed / block-diagonal head."""
    enc = params["encoder"]
    s1, s2, s3, s4 = spatials[1:]
    bf = jnp.bfloat16
    ops = []
    widths_in = [w_in, s1, s2, s3]
    widths_out = [s1, s2, s3, s4]
    strides = [2, 1, 1, 1]
    scales = [1.0 / 255.0, 1.0, 1.0, 1.0]        # obs/255 folded into conv1
    for (cw, cb), win, st, so, sc in zip(enc["convs"], widths_in, strides,
                                         widths_out, scales):
        ops.append(_band_matrices(cw, win, st, scale=sc).astype(bf))
        ops.append(jnp.tile(cb, so)[None, :].astype(jnp.float32))
    ops += [enc["fc_w"].astype(bf), enc["fc_b"][None, :].astype(jnp.float32),
            enc["ln_g"][None, :].astype(jnp.float32),
            enc["ln_b"][None, :].astype(jnp.float32)]

    d = enc["fc_w"].shape[1]
    q1, q2 = params["Q1"], params["Q2"]
    hq = q1[0].shape[1]
    qw1f = jnp.concatenate([q1[0][:d], q2[0][:d]], axis=1).astype(bf)    # (D, 2Hq)
    qw1a = jnp.concatenate([q1[0][d:], q2[0][d:]], axis=1).astype(bf)    # (A, 2Hq)
    qb1 = jnp.concatenate([q1[1], q2[1]])[None, :].astype(jnp.float32)
    qw2 = (jnp.zeros((2 * hq, 2 * hq), jnp.float32)
           .at[:hq, :hq].set(q1[2]).at[hq:, hq:].set(q2[2])).astype(bf)  # block-diag
    qb2 = jnp.concatenate([q1[3], q2[3]])[None, :].astype(jnp.float32)
    qw3 = (jnp.zeros((2 * hq, 2), jnp.float32)
           .at[:hq, 0:1].set(q1[4]).at[hq:, 1:2].set(q2[4])).astype(bf)
    qb3 = jnp.concatenate([q1[5], q2[5]])[None, :].astype(jnp.float32)
    ops += [qw1f, qw1a, qb1, qw2, qb2, qw3, qb3]
    return ops


def _prep_obs(aug_obs, tb):
    """NCHW pixels -> bf16, channel-minor rows, row-parity split, batch-block
    stacked: (nb, H*TB, W*C) with stacked row index = parity_row*TB + sample."""
    b, c, h, w = aug_obs.shape
    nb = b // tb
    x = jnp.transpose(aug_obs.astype(jnp.float32), (2, 0, 3, 1))   # (H, B, W, C)
    x = x.reshape(h, b, w * c)                                     # lane-dense rows
    x = jnp.concatenate([x[0::2], x[1::2]], axis=0)                # even rows, then odd
    x = x.reshape(h, nb, tb, w * c).transpose(1, 0, 2, 3)          # (nb, H, TB, W*C)
    return x.reshape(nb, h * tb, w * c).astype(jnp.bfloat16)


def critic_forward(params, aug_obs, action, detach_encoder=False, batch_block=16):
    # TODO(synk): detach_encoder / backward would need stop_gradient + custom_vjp;
    # forward values are identical, which is all this implements.
    assert aug_obs.shape[0] == action.shape[0]
    b, c, h, w = aug_obs.shape
    assert h == w, "square input expected by the DrQ pixel encoder"
    a_dim = action.shape[1]

    # conv spatial chain: one stride-2 then three stride-1 VALID 3x3 convs -> 1x1
    spatials = [h, (h - 3) // 2 + 1]
    for _ in range(3):
        spatials.append(spatials[-1] - 2)
    assert spatials[-1] == 1, "encoder is expected to reduce spatial dims to 1x1"

    # Batch blocking: TB samples per grid step.  Tune batch_block per chip
    # (v5e ~16, v6e/v7x ~32; choose it so the grid has >=2 steps on v7x megacore).
    tb = min(batch_block, b)
    nb = -(-b // tb)
    bp = nb * tb
    if bp != b:                                   # pad batch to a multiple of TB
        aug_obs = jnp.concatenate(
            [aug_obs, jnp.zeros((bp - b, c, h, w), aug_obs.dtype)], axis=0)
        action = jnp.concatenate(
            [action, jnp.zeros((bp - b, a_dim), action.dtype)], axis=0)

    ops = _pack_params(params, w, spatials)       # in a training loop: pack once
    obs_p = _prep_obs(aug_obs, tb)                # (nb, H*TB, W*C) bf16
    act_p = action.astype(jnp.float32).reshape(nb, tb, a_dim)

    def rep_spec(x):                              # weights: VMEM-resident, full block
        n = x.ndim
        return pl.BlockSpec(x.shape, lambda i, n=n: (0,) * n)

    in_specs = [
        pl.BlockSpec((None, h * tb, w * c), lambda i: (i, 0, 0)),
        pl.BlockSpec((None, tb, a_dim), lambda i: (i, 0, 0)),
    ] + [rep_spec(x) for x in ops]

    out = pl.pallas_call(
        functools.partial(_critic_fused_kernel, tb=tb, spatials=tuple(spatials)),
        out_shape=jax.ShapeDtypeStruct((nb, tb, 2), jnp.float32),
        grid=(nb,),
        in_specs=in_specs,
        out_specs=pl.BlockSpec((None, tb, 2), lambda i: (i, 0, 0)),
        compiler_params=pltpu.CompilerParams(dimension_semantics=("parallel",)),
    )(obs_p, act_p, *ops)

    q = out.reshape(bp, 2)[:b]
    return q[:, 0:1], q[:, 1:2]


# --------------------------- pure-JAX reference ------------------------------ #

def im2col(x, kh, kw, stride):
    """x: (N, C, H, W) -> (N*Ho*Wo, C*kh*kw), VALID padding (PyTorch ordering)."""
    N, C, H, W = x.shape
    Ho = (H - kh) // stride + 1
    Wo = (W - kw) // stride + 1
    cols = []
    for i in range(kh):
        for j in range(kw):
            cols.append(x[:, :, i:i + stride * Ho:stride, j:j + stride * Wo:stride])
    cols = jnp.stack(cols, axis=0).reshape(kh, kw, N, C, Ho, Wo)
    cols = cols.transpose(2, 4, 5, 3, 0, 1).reshape(N * Ho * Wo, C * kh * kw)
    return cols, Ho, Wo


def _ref_linear(x, w, b, relu=False):
    y = x @ w + b
    return jnp.maximum(y, 0.0) if relu else y


def critic_forward_ref(params, aug_obs, action):
    h = aug_obs.astype(jnp.float32) / 255.0
    strides = [2, 1, 1, 1]
    for (w, b), s in zip(params["encoder"]["convs"], strides):
        O = w.shape[0]
        cols, Ho, Wo = im2col(h, 3, 3, s)
        y = _ref_linear(cols, w.reshape(O, -1).T, b, relu=True)
        h = y.reshape(h.shape[0], Ho, Wo, O).transpose(0, 3, 1, 2)
    h = h.reshape(h.shape[0], -1)
    y = _ref_linear(h, params["encoder"]["fc_w"], params["encoder"]["fc_b"])
    mu = jnp.mean(y, axis=-1, keepdims=True)
    var = jnp.mean(jnp.square(y - mu), axis=-1, keepdims=True)
    feat = jnp.tanh((y - mu) * jax.lax.rsqrt(var + 1e-5)
                    * params["encoder"]["ln_g"] + params["encoder"]["ln_b"])
    oa = jnp.concatenate([feat, action.astype(jnp.float32)], axis=-1)
    qs = []
    for w1, b1, w2, b2, w3, b3 in (params["Q1"], params["Q2"]):
        t = _ref_linear(oa, w1, b1, relu=True)
        t = _ref_linear(t, w2, b2, relu=True)
        qs.append(_ref_linear(t, w3, b3))
    return qs[0], qs[1]


# ------------------------------ param init ----------------------------------- #

def init_params(key, obs_shape, action_dim, feature_dim, hidden_dim):
    C = obs_shape[0]
    num_filters = 32
    keys = iter(jax.random.split(key, 32))

    def nrm(shape, scale=0.1):
        return scale * jax.random.normal(next(keys), shape, dtype=jnp.float32)

    convs = []
    in_c = C
    for _ in range(4):
        convs.append((nrm((num_filters, in_c, 3, 3)),
                      jnp.zeros((num_filters,), jnp.float32)))
        in_c = num_filters

    flat_dim = num_filters * 1 * 1          # spatial: 16 -> 7 -> 5 -> 3 -> 1
    enc = dict(convs=convs,
               fc_w=nrm((flat_dim, feature_dim)),
               fc_b=jnp.zeros((feature_dim,), jnp.float32),
               ln_g=jnp.ones((feature_dim,), jnp.float32),
               ln_b=jnp.zeros((feature_dim,), jnp.float32))

    def q_head(in_dim):
        return (nrm((in_dim, hidden_dim)), jnp.zeros((hidden_dim,), jnp.float32),
                nrm((hidden_dim, hidden_dim)), jnp.zeros((hidden_dim,), jnp.float32),
                nrm((hidden_dim, 1)), jnp.zeros((1,), jnp.float32))

    in_dim = feature_dim + action_dim
    return dict(encoder=enc, Q1=q_head(in_dim), Q2=q_head(in_dim))


# ---------------------------------- main -------------------------------------- #

if __name__ == "__main__":
    key = jax.random.PRNGKey(0)
    k_obs, k_act, k_par, k_obs2, k_act2 = jax.random.split(key, 5)

    B, C, H, W = 2, 4, 16, 16          # aug_obs: NCHW, pixel-like values
    action_dim = 6
    feature_dim = 32
    hidden_dim = 32                    # hidden_depth = 2

    aug_obs = jax.random.uniform(k_obs, (B, C, H, W), jnp.float32, 0.0, 255.0)
    action = jax.random.uniform(k_act, (B, action_dim), jnp.float32, -1.0, 1.0)
    params = init_params(k_par, (C, H, W), action_dim, feature_dim, hidden_dim)

    critic_fn = jax.jit(critic_forward)
    q1, q2 = critic_fn(params, aug_obs, action)
    q1 = jax.block_until_ready(q1)
    q2 = jax.block_until_ready(q2)

    r1, r2 = critic_forward_ref(params, aug_obs, action)
    assert q1.shape == (B, 1) and q2.shape == (B, 1)
    # bf16 MXU path vs f32 reference tolerance
    assert jnp.allclose(q1, r1, atol=2e-2, rtol=2e-2)
    assert jnp.allclose(q2, r2, atol=2e-2, rtol=2e-2)

    # second check: exercise a multi-step grid + batch padding (B=5, TB=2 -> 3 steps)
    B2 = 5
    aug_obs2 = jax.random.uniform(k_obs2, (B2, C, H, W), jnp.float32, 0.0, 255.0)
    action2 = jax.random.uniform(k_act2, (B2, action_dim), jnp.float32, -1.0, 1.0)
    critic_fn2 = jax.jit(functools.partial(critic_forward, batch_block=2))
    p1, p2 = critic_fn2(params, aug_obs2, action2)
    p1 = jax.block_until_ready(p1)
    p2 = jax.block_until_ready(p2)
    s1, s2 = critic_forward_ref(params, aug_obs2, action2)
    assert p1.shape == (B2, 1) and p2.shape == (B2, 1)
    assert jnp.allclose(p1, s1, atol=2e-2, rtol=2e-2)
    assert jnp.allclose(p2, s2, atol=2e-2, rtol=2e-2)

    print("KERNEL_OK")
</pallas_src>

<mosaic_0001>
module attributes {stable_mosaic.version = 11 : i64} {
  func.func @_critic_fused_kernel(%arg0: i32, %arg1: memref<1x32x64xbf16, #tpu.memory_space<vmem>>, %arg2: memref<1x2x6xf32, #tpu.memory_space<vmem>>, %arg3: memref<3x64x224xbf16, #tpu.memory_space<vmem>>, %arg4: memref<1x224xf32, #tpu.memory_space<vmem>>, %arg5: memref<3x224x160xbf16, #tpu.memory_space<vmem>>, %arg6: memref<1x160xf32, #tpu.memory_space<vmem>>, %arg7: memref<3x160x96xbf16, #tpu.memory_space<vmem>>, %arg8: memref<1x96xf32, #tpu.memory_space<vmem>>, %arg9: memref<3x96x32xbf16, #tpu.memory_space<vmem>>, %arg10: memref<1x32xf32, #tpu.memory_space<vmem>>, %arg11: memref<32x32xbf16, #tpu.memory_space<vmem>>, %arg12: memref<1x32xf32, #tpu.memory_space<vmem>>, %arg13: memref<1x32xf32, #tpu.memory_space<vmem>>, %arg14: memref<1x32xf32, #tpu.memory_space<vmem>>, %arg15: memref<32x64xbf16, #tpu.memory_space<vmem>>, %arg16: memref<6x64xbf16, #tpu.memory_space<vmem>>, %arg17: memref<1x64xf32, #tpu.memory_space<vmem>>, %arg18: memref<64x64xbf16, #tpu.memory_space<vmem>>, %arg19: memref<1x64xf32, #tpu.memory_space<vmem>>, %arg20: memref<64x2xbf16, #tpu.memory_space<vmem>>, %arg21: memref<1x2xf32, #tpu.memory_space<vmem>>, %arg22: memref<1x2x2xf32, #tpu.memory_space<vmem>>) attributes {dimension_semantics = [#tpu.dimension_semantics<parallel>], iteration_bounds = array<i64: 1>, scalar_prefetch = 0 : i64, scratch_operands = 0 : i64, tpu.core_type = #tpu.core_type<tc>, window_params = [{transform_indices = @transform_0, window_bounds = array<i64: 1, 32, 64>}, {transform_indices = @transform_1, window_bounds = array<i64: 1, 2, 6>}, {pipeline_mode = #tpu.pipeline_mode<synchronous>, transform_indices = @transform_2, window_bounds = array<i64: 3, 64, 224>}, {pipeline_mode = #tpu.pipeline_mode<synchronous>, transform_indices = @transform_3, window_bounds = array<i64: 1, 224>}, {pipeline_mode = #tpu.pipeline_mode<synchronous>, transform_indices = @transform_4, window_bounds = array<i64: 3, 224, 160>}, {pipeline_mode = #tpu.pipeline_mode<synchronous>, transform_indices = @transform_5, window_bounds = array<i64: 1, 160>}, {pipeline_mode = #tpu.pipeline_mode<synchronous>, transform_indices = @transform_6, window_bounds = array<i64: 3, 160, 96>}, {pipeline_mode = #tpu.pipeline_mode<synchronous>, transform_indices = @transform_7, window_bounds = array<i64: 1, 96>}, {pipeline_mode = #tpu.pipeline_mode<synchronous>, transform_indices = @transform_8, window_bounds = array<i64: 3, 96, 32>}, {pipeline_mode = #tpu.pipeline_mode<synchronous>, transform_indices = @transform_9, window_bounds = array<i64: 1, 32>}, {pipeline_mode = #tpu.pipeline_mode<synchronous>, transform_indices = @transform_10, window_bounds = array<i64: 32, 32>}, {pipeline_mode = #tpu.pipeline_mode<synchronous>, transform_indices = @transform_11, window_bounds = array<i64: 1, 32>}, {pipeline_mode = #tpu.pipeline_mode<synchronous>, transform_indices = @transform_12, window_bounds = array<i64: 1, 32>}, {pipeline_mode = #tpu.pipeline_mode<synchronous>, transform_indices = @transform_13, window_bounds = array<i64: 1, 32>}, {pipeline_mode = #tpu.pipeline_mode<synchronous>, transform_indices = @transform_14, window_bounds = array<i64: 32, 64>}, {pipeline_mode = #tpu.pipeline_mode<synchronous>, transform_indices = @transform_15, window_bounds = array<i64: 6, 64>}, {pipeline_mode = #tpu.pipeline_mode<synchronous>, transform_indices = @transform_16, window_bounds = array<i64: 1, 64>}, {pipeline_mode = #tpu.pipeline_mode<synchronous>, transform_indices = @transform_17, window_bounds = array<i64: 64, 64>}, {pipeline_mode = #tpu.pipeline_mode<synchronous>, transform_indices = @transform_18, window_bounds = array<i64: 1, 64>}, {pipeline_mode = #tpu.pipeline_mode<synchronous>, transform_indices = @transform_19, window_bounds = array<i64: 64, 2>}, {pipeline_mode = #tpu.pipeline_mode<synchronous>, transform_indices = @transform_20, window_bounds = array<i64: 1, 2>}, {transform_indices = @transform_21, window_bounds = array<i64: 1, 2, 2>}]} {
    %c0 = arith.constant 0 : index
    %c0_0 = arith.constant 0 : index
    %c0_1 = arith.constant 0 : index
    %0 = vector.load %arg1[%c0, %c0_0, %c0_1] : memref<1x32x64xbf16, #tpu.memory_space<vmem>>, vector<1x14x64xbf16>
    %1 = vector.shape_cast %0 : vector<1x14x64xbf16> to vector<14x64xbf16>
    %c0_2 = arith.constant 0 : index
    %c0_3 = arith.constant 0 : index
    %c0_4 = arith.constant 0 : index
    %2 = vector.load %arg3[%c0_2, %c0_3, %c0_4] : memref<3x64x224xbf16, #tpu.memory_space<vmem>>, vector<1x64x224xbf16>
    %3 = vector.shape_cast %2 : vector<1x64x224xbf16> to vector<64x224xbf16>
    %cst = arith.constant dense<0.000000e+00> : vector<14x224xf32>
    %4 = tpu.matmul %1, %3, %cst {dimension_numbers = #tpu.dot_dimension_numbers<[1], [0], [0], [1], [0, 0, 1, 1], [], []>} : vector<14x64xbf16>, vector<64x224xbf16>, vector<14x224xf32> -> vector<14x224xf32>
    %c0_5 = arith.constant 0 : index
    %c16 = arith.constant 16 : index
    %c0_6 = arith.constant 0 : index
    %5 = vector.load %arg1[%c0_5, %c16, %c0_6] : memref<1x32x64xbf16, #tpu.memory_space<vmem>>, vector<1x14x64xbf16>
    %6 = vector.shape_cast %5 : vector<1x14x64xbf16> to vector<14x64xbf16>
    %c1 = arith.constant 1 : index
    %c0_7 = arith.constant 0 : index
    %c0_8 = arith.constant 0 : index
    %7 = vector.load %arg3[%c1, %c0_7, %c0_8] : memref<3x64x224xbf16, #tpu.memory_space<vmem>>, vector<1x64x224xbf16>
    %8 = vector.shape_cast %7 : vector<1x64x224xbf16> to vector<64x224xbf16>
    %cst_9 = arith.constant dense<0.000000e+00> : vector<14x224xf32>
    %9 = tpu.matmul %6, %8, %cst_9 {dimension_numbers = #tpu.dot_dimension_numbers<[1], [0], [0], [1], [0, 0, 1, 1], [], []>} : vector<14x64xbf16>, vector<64x224xbf16>, vector<14x224xf32> -> vector<14x224xf32>
    %10 = arith.addf %4, %9 : vector<14x224xf32>
    %c0_10 = arith.constant 0 : index
    %c2 = arith.constant 2 : index
    %c0_11 = arith.constant 0 : index
    %11 = vector.load %arg1[%c0_10, %c2, %c0_11] : memref<1x32x64xbf16, #tpu.memory_space<vmem>>, vector<1x14x64xbf16>
    %12 = vector.shape_cast %11 : vector<1x14x64xbf16> to vector<14x64xbf16>
    %c2_12 = arith.constant 2 : index
    %c0_13 = arith.constant 0 : index
    %c0_14 = arith.constant 0 : index
    %13 = vector.load %arg3[%c2_12, %c0_13, %c0_14] : memref<3x64x224xbf16, #tpu.memory_space<vmem>>, vector<1x64x224xbf16>
    %14 = vector.shape_cast %13 : vector<1x64x224xbf16> to vector<64x224xbf16>
    %cst_15 = arith.constant dense<0.000000e+00> : vector<14x224xf32>
    %15 = tpu.matmul %12, %14, %cst_15 {dimension_numbers = #tpu.dot_dimension_numbers<[1], [0], [0], [1], [0, 0, 1, 1], [], []>} : vector<14x64xbf16>, vector<64x224xbf16>, vector<14x224xf32> -> vector<14x224xf32>
    %16 = arith.addf %10, %15 : vector<14x224xf32>
    %c0_16 = arith.constant 0 : index
    %c0_17 = arith.constant 0 : index
    %17 = vector.load %arg4[%c0_16, %c0_17] : memref<1x224xf32, #tpu.memory_space<vmem>>, vector<1x224xf32>
    %18 = vector.broadcast %17 : vector<1x224xf32> to vector<14x224xf32>
    %19 = arith.addf %16, %18 : vector<14x224xf32>
    %cst_18 = arith.constant 0.000000e+00 : f32
    %20 = vector.broadcast %cst_18 : f32 to vector<14x224xf32>
    %21 = arith.maximumf %19, %20 : vector<14x224xf32>
    %22 = arith.truncf %21 : vector<14x224xf32> to vector<14x224xbf16>
    %23 = vector.extract_strided_slice %22 {offsets = [0, 0], sizes = [10, 224], strides = [1, 1]} : vector<14x224xbf16> to vector<10x224xbf16>
    %c0_19 = arith.constant 0 : index
    %c0_20 = arith.constant 0 : index
    %c0_21 = arith.constant 0 : index
    %24 = vector.load %arg5[%c0_19, %c0_20, %c0_21] : memref<3x224x160xbf16, #tpu.memory_space<vmem>>, vector<1x224x160xbf16>
    %25 = vector.shape_cast %24 : vector<1x224x160xbf16> to vector<224x160xbf16>
    %cst_22 = arith.constant dense<0.000000e+00> : vector<10x160xf32>
    %26 = tpu.matmul %23, %25, %cst_22 {dimension_numbers = #tpu.dot_dimension_numbers<[1], [0], [0], [1], [0, 0, 1, 1], [], []>} : vector<10x224xbf16>, vector<224x160xbf16>, vector<10x160xf32> -> vector<10x160xf32>
    %27 = vector.extract_strided_slice %22 {offsets = [2, 0], sizes = [10, 224], strides = [1, 1]} : vector<14x224xbf16> to vector<10x224xbf16>
    %c1_23 = arith.constant 1 : index
    %c0_24 = arith.constant 0 : index
    %c0_25 = arith.constant 0 : index
    %28 = vector.load %arg5[%c1_23, %c0_24, %c0_25] : memref<3x224x160xbf16, #tpu.memory_space<vmem>>, vector<1x224x160xbf16>
    %29 = vector.shape_cast %28 : vector<1x224x160xbf16> to vector<224x160xbf16>
    %cst_26 = arith.constant dense<0.000000e+00> : vector<10x160xf32>
    %30 = tpu.matmul %27, %29, %cst_26 {dimension_numbers = #tpu.dot_dimension_numbers<[1], [0], [0], [1], [0, 0, 1, 1], [], []>} : vector<10x224xbf16>, vector<224x160xbf16>, vector<10x160xf32> -> vector<10x160xf32>
    %31 = arith.addf %26, %30 : vector<10x160xf32>
    %32 = vector.extract_strided_slice %22 {offsets = [4, 0], sizes = [10, 224], strides = [1, 1]} : vector<14x224xbf16> to vector<10x224xbf16>
    %c2_27 = arith.constant 2 : index
    %c0_28 = arith.constant 0 : index
    %c0_29 = arith.constant 0 : index
    %33 = vector.load %arg5[%c2_27, %c0_28, %c0_29] : memref<3x224x160xbf16, #tpu.memory_space<vmem>>, vector<1x224x160xbf16>
    %34 = vector.shape_cast %33 : vector<1x224x160xbf16> to vector<224x160xbf16>
    %cst_30 = arith.constant dense<0.000000e+00> : vector<10x160xf32>
    %35 = tpu.matmul %32, %34, %cst_30 {dimension_numbers = #tpu.dot_dimension_numbers<[1], [0], [0], [1], [0, 0, 1, 1], [], []>} : vector<10x224xbf16>, vector<224x160xbf16>, vector<10x160xf32> -> vector<10x160xf32>
    %36 = arith.addf %31, %35 : vector<10x160xf32>
    %c0_31 = arith.constant 0 : index
    %c0_32 = arith.constant 0 : index
    %37 = vector.load %arg6[%c0_31, %c0_32] : memref<1x160xf32, #tpu.memory_space<vmem>>, vector<1x160xf32>
    %38 = vector.broadcast %37 : vector<1x160xf32> to vector<10x160xf32>
    %39 = arith.addf %36, %38 : vector<10x160xf32>
    %cst_33 = arith.constant 0.000000e+00 : f32
    %40 = vector.broadcast %cst_33 : f32 to vector<10x160xf32>
    %41 = arith.maximumf %39, %40 : vector<10x160xf32>
    %42 = arith.truncf %41 : vector<10x160xf32> to vector<10x160xbf16>
    %43 = vector.extract_strided_slice %42 {offsets = [0, 0], sizes = [6, 160], strides = [1, 1]} : vector<10x160xbf16> to vector<6x160xbf16>
    %c0_34 = arith.constant 0 : index
    %c0_35 = arith.constant 0 : index
    %c0_36 = arith.constant 0 : index
    %44 = vector.load %arg7[%c0_34, %c0_35, %c0_36] : memref<3x160x96xbf16, #tpu.memory_space<vmem>>, vector<1x160x96xbf16>
    %45 = vector.shape_cast %44 : vector<1x160x96xbf16> to vector<160x96xbf16>
    %cst_37 = arith.constant dense<0.000000e+00> : vector<6x96xf32>
    %46 = tpu.matmul %43, %45, %cst_37 {dimension_numbers = #tpu.dot_dimension_numbers<[1], [0], [0], [1], [0, 0, 1, 1], [], []>} : vector<6x160xbf16>, vector<160x96xbf16>, vector<6x96xf32> -> vector<6x96xf32>
    %47 = vector.extract_strided_slice %42 {offsets = [2, 0], sizes = [6, 160], strides = [1, 1]} : vector<10x160xbf16> to vector<6x160xbf16>
    %c1_38 = arith.constant 1 : index
    %c0_39 = arith.constant 0 : index
    %c0_40 = arith.constant 0 : index
    %48 = vector.load %arg7[%c1_38, %c0_39, %c0_40] : memref<3x160x96xbf16, #tpu.memory_space<vmem>>, vector<1x160x96xbf16>
    %49 = vector.shape_cast %48 : vector<1x160x96xbf16> to vector<160x96xbf16>
    %cst_41 = arith.constant dense<0.000000e+00> : vector<6x96xf32>
    %50 = tpu.matmul %47, %49, %cst_41 {dimension_numbers = #tpu.dot_dimension_numbers<[1], [0], [0], [1], [0, 0, 1, 1], [], []>} : vector<6x160xbf16>, vector<160x96xbf16>, vector<6x96xf32> -> vector<6x96xf32>
    %51 = arith.addf %46, %50 : vector<6x96xf32>
    %52 = vector.extract_strided_slice %42 {offsets = [4, 0], sizes = [6, 160], strides = [1, 1]} : vector<10x160xbf16> to vector<6x160xbf16>
    %c2_42 = arith.constant 2 : index
    %c0_43 = arith.constant 0 : index
    %c0_44 = arith.constant 0 : index
    %53 = vector.load %arg7[%c2_42, %c0_43, %c0_44] : memref<3x160x96xbf16, #tpu.memory_space<vmem>>, vector<1x160x96xbf16>
    %54 = vector.shape_cast %53 : vector<1x160x96xbf16> to vector<160x96xbf16>
    %cst_45 = arith.constant dense<0.000000e+00> : vector<6x96xf32>
    %55 = tpu.matmul %52, %54, %cst_45 {dimension_numbers = #tpu.dot_dimension_numbers<[1], [0], [0], [1], [0, 0, 1, 1], [], []>} : vector<6x160xbf16>, vector<160x96xbf16>, vector<6x96xf32> -> vector<6x96xf32>
    %56 = arith.addf %51, %55 : vector<6x96xf32>
    %c0_46 = arith.constant 0 : index
    %c0_47 = arith.constant 0 : index
    %57 = vector.load %arg8[%c0_46, %c0_47] : memref<1x96xf32, #tpu.memory_space<vmem>>, vector<1x96xf32>
    %58 = vector.broadcast %57 : vector<1x96xf32> to vector<6x96xf32>
    %59 = arith.addf %56, %58 : vector<6x96xf32>
    %cst_48 = arith.constant 0.000000e+00 : f32
    %60 = vector.broadcast %cst_48 : f32 to vector<6x96xf32>
    %61 = arith.maximumf %59, %60 : vector<6x96xf32>
    %62 = arith.truncf %61 : vector<6x96xf32> to vector<6x96xbf16>
    %63 = vector.extract_strided_slice %62 {offsets = [0, 0], sizes = [2, 96], strides = [1, 1]} : vector<6x96xbf16> to vector<2x96xbf16>
    %c0_49 = arith.constant 0 : index
    %c0_50 = arith.constant 0 : index
    %c0_51 = arith.constant 0 : index
    %64 = vector.load %arg9[%c0_49, %c0_50, %c0_51] : memref<3x96x32xbf16, #tpu.memory_space<vmem>>, vector<1x96x32xbf16>
    %65 = vector.shape_cast %64 : vector<1x96x32xbf16> to vector<96x32xbf16>
    %cst_52 = arith.constant dense<0.000000e+00> : vector<2x32xf32>
    %66 = tpu.matmul %63, %65, %cst_52 {dimension_numbers = #tpu.dot_dimension_numbers<[1], [0], [0], [1], [0, 0, 1, 1], [], []>} : vector<2x96xbf16>, vector<96x32xbf16>, vector<2x32xf32> -> vector<2x32xf32>
    %67 = vector.extract_strided_slice %62 {offsets = [2, 0], sizes = [2, 96], strides = [1, 1]} : vector<6x96xbf16> to vector<2x96xbf16>
    %c1_53 = arith.constant 1 : index
    %c0_54 = arith.constant 0 : index
    %c0_55 = arith.constant 0 : index
    %68 = vector.load %arg9[%c1_53, %c0_54, %c0_55] : memref<3x96x32xbf16, #tpu.memory_space<vmem>>, vector<1x96x32xbf16>
    %69 = vector.shape_cast %68 : vector<1x96x32xbf16> to vector<96x32xbf16>
    %cst_56 = arith.constant dense<0.000000e+00> : vector<2x32xf32>
    %70 = tpu.matmul %67, %69, %cst_56 {dimension_numbers = #tpu.dot_dimension_numbers<[1], [0], [0], [1], [0, 0, 1, 1], [], []>} : vector<2x96xbf16>, vector<96x32xbf16>, vector<2x32xf32> -> vector<2x32xf32>
    %71 = arith.addf %66, %70 : vector<2x32xf32>
    %72 = vector.extract_strided_slice %62 {offsets = [4, 0], sizes = [2, 96], strides = [1, 1]} : vector<6x96xbf16> to vector<2x96xbf16>
    %c2_57 = arith.constant 2 : index
    %c0_58 = arith.constant 0 : index
    %c0_59 = arith.constant 0 : index
    %73 = vector.load %arg9[%c2_57, %c0_58, %c0_59] : memref<3x96x32xbf16, #tpu.memory_space<vmem>>, vector<1x96x32xbf16>
    %74 = vector.shape_cast %73 : vector<1x96x32xbf16> to vector<96x32xbf16>
    %cst_60 = arith.constant dense<0.000000e+00> : vector<2x32xf32>
    %75 = tpu.matmul %72, %74, %cst_60 {dimension_numbers = #tpu.dot_dimension_numbers<[1], [0], [0], [1], [0, 0, 1, 1], [], []>} : vector<2x96xbf16>, vector<96x32xbf16>, vector<2x32xf32> -> vector<2x32xf32>
    %76 = arith.addf %71, %75 : vector<2x32xf32>
    %c0_61 = arith.constant 0 : index
    %c0_62 = arith.constant 0 : index
    %77 = vector.load %arg10[%c0_61, %c0_62] : memref<1x32xf32, #tpu.memory_space<vmem>>, vector<1x32xf32>
    %78 = vector.broadcast %77 : vector<1x32xf32> to vector<2x32xf32>
    %79 = arith.addf %76, %78 : vector<2x32xf32>
    %cst_63 = arith.constant 0.000000e+00 : f32
    %80 = vector.broadcast %cst_63 : f32 to vector<2x32xf32>
    %81 = arith.maximumf %79, %80 : vector<2x32xf32>
    %82 = arith.truncf %81 : vector<2x32xf32> to vector<2x32xbf16>
    %c0_64 = arith.constant 0 : index
    %c0_65 = arith.constant 0 : index
    %83 = vector.load %arg11[%c0_64, %c0_65] : memref<32x32xbf16, #tpu.memory_space<vmem>>, vector<32x32xbf16>
    %cst_66 = arith.constant dense<0.000000e+00> : vector<2x32xf32>
    %84 = tpu.matmul %82, %83, %cst_66 {dimension_numbers = #tpu.dot_dimension_numbers<[1], [0], [0], [1], [0, 0, 1, 1], [], []>} : vector<2x32xbf16>, vector<32x32xbf16>, vector<2x32xf32> -> vector<2x32xf32>
    %c0_67 = arith.constant 0 : index
    %c0_68 = arith.constant 0 : index
    %85 = vector.load %arg12[%c0_67, %c0_68] : memref<1x32xf32, #tpu.memory_space<vmem>>, vector<1x32xf32>
    %86 = vector.broadcast %85 : vector<1x32xf32> to vector<2x32xf32>
    %87 = arith.addf %84, %86 : vector<2x32xf32>
    %cst_69 = arith.constant dense<0.000000e+00> : vector<2xf32>
    %88 = vector.multi_reduction <add>, %87, %cst_69 [1] : vector<2x32xf32> to vector<2xf32>
    %89 = vector.shape_cast %88 : vector<2xf32> to vector<2x1xf32>
    %cst_70 = arith.constant 3.200000e+01 : f32
    %90 = vector.broadcast %cst_70 : f32 to vector<2x1xf32>
    %91 = arith.divf %89, %90 : vector<2x1xf32>
    %92 = vector.broadcast %91 : vector<2x1xf32> to vector<2x32xf32>
    %93 = arith.subf %87, %92 : vector<2x32xf32>
    %94 = arith.mulf %93, %93 : vector<2x32xf32>
    %cst_71 = arith.constant dense<0.000000e+00> : vector<2xf32>
    %95 = vector.multi_reduction <add>, %94, %cst_71 [1] : vector<2x32xf32> to vector<2xf32>
    %96 = vector.shape_cast %95 : vector<2xf32> to vector<2x1xf32>
    %cst_72 = arith.constant 3.200000e+01 : f32
    %97 = vector.broadcast %cst_72 : f32 to vector<2x1xf32>
    %98 = arith.divf %96, %97 : vector<2x1xf32>
    %99 = vector.broadcast %91 : vector<2x1xf32> to vector<2x32xf32>
    %100 = arith.subf %87, %99 : vector<2x32xf32>
    %cst_73 = arith.constant 9.99999974E-6 : f32
    %101 = vector.broadcast %cst_73 : f32 to vector<2x1xf32>
    %102 = arith.addf %98, %101 : vector<2x1xf32>
    %103 = math.rsqrt %102 : vector<2x1xf32>
    %104 = vector.broadcast %103 : vector<2x1xf32> to vector<2x32xf32>
    %105 = arith.mulf %100, %104 : vector<2x32xf32>
    %c0_74 = arith.constant 0 : index
    %c0_75 = arith.constant 0 : index
    %106 = vector.load %arg13[%c0_74, %c0_75] : memref<1x32xf32, #tpu.memory_space<vmem>>, vector<1x32xf32>
    %107 = vector.broadcast %106 : vector<1x32xf32> to vector<2x32xf32>
    %108 = arith.mulf %105, %107 : vector<2x32xf32>
    %c0_76 = arith.constant 0 : index
    %c0_77 = arith.constant 0 : index
    %109 = vector.load %arg14[%c0_76, %c0_77] : memref<1x32xf32, #tpu.memory_space<vmem>>, vector<1x32xf32>
    %110 = vector.broadcast %109 : vector<1x32xf32> to vector<2x32xf32>
    %111 = arith.addf %108, %110 : vector<2x32xf32>
    %112 = math.tanh %111 : vector<2x32xf32>
    %c0_78 = arith.constant 0 : index
    %c0_79 = arith.constant 0 : index
    %c0_80 = arith.constant 0 : index
    %113 = vector.load %arg2[%c0_78, %c0_79, %c0_80] : memref<1x2x6xf32, #tpu.memory_space<vmem>>, vector<1x2x6xf32>
    %114 = vector.shape_cast %113 : vector<1x2x6xf32> to vector<2x6xf32>
    %115 = arith.truncf %114 : vector<2x6xf32> to vector<2x6xbf16>
    %116 = arith.truncf %112 : vector<2x32xf32> to vector<2x32xbf16>
    %c0_81 = arith.constant 0 : index
    %c0_82 = arith.constant 0 : index
    %117 = vector.load %arg15[%c0_81, %c0_82] : memref<32x64xbf16, #tpu.memory_space<vmem>>, vector<32x64xbf16>
    %cst_83 = arith.constant dense<0.000000e+00> : vector<2x64xf32>
    %118 = tpu.matmul %116, %117, %cst_83 {dimension_numbers = #tpu.dot_dimension_numbers<[1], [0], [0], [1], [0, 0, 1, 1], [], []>} : vector<2x32xbf16>, vector<32x64xbf16>, vector<2x64xf32> -> vector<2x64xf32>
    %c0_84 = arith.constant 0 : index
    %c0_85 = arith.constant 0 : index
    %119 = vector.load %arg16[%c0_84, %c0_85] : memref<6x64xbf16, #tpu.memory_space<vmem>>, vector<6x64xbf16>
    %cst_86 = arith.constant dense<0.000000e+00> : vector<2x64xf32>
    %120 = tpu.matmul %115, %119, %cst_86 {dimension_numbers = #tpu.dot_dimension_numbers<[1], [0], [0], [1], [0, 0, 1, 1], [], []>} : vector<2x6xbf16>, vector<6x64xbf16>, vector<2x64xf32> -> vector<2x64xf32>
    %121 = arith.addf %118, %120 : vector<2x64xf32>
    %c0_87 = arith.constant 0 : index
    %c0_88 = arith.constant 0 : index
    %122 = vector.load %arg17[%c0_87, %c0_88] : memref<1x64xf32, #tpu.memory_space<vmem>>, vector<1x64xf32>
    %123 = vector.broadcast %122 : vector<1x64xf32> to vector<2x64xf32>
    %124 = arith.addf %121, %123 : vector<2x64xf32>
    %cst_89 = arith.constant 0.000000e+00 : f32
    %125 = vector.broadcast %cst_89 : f32 to vector<2x64xf32>
    %126 = arith.maximumf %124, %125 : vector<2x64xf32>
    %127 = arith.truncf %126 : vector<2x64xf32> to vector<2x64xbf16>
    %c0_90 = arith.constant 0 : index
    %c0_91 = arith.constant 0 : index
    %128 = vector.load %arg18[%c0_90, %c0_91] : memref<64x64xbf16, #tpu.memory_space<vmem>>, vector<64x64xbf16>
    %cst_92 = arith.constant dense<0.000000e+00> : vector<2x64xf32>
    %129 = tpu.matmul %127, %128, %cst_92 {dimension_numbers = #tpu.dot_dimension_numbers<[1], [0], [0], [1], [0, 0, 1, 1], [], []>} : vector<2x64xbf16>, vector<64x64xbf16>, vector<2x64xf32> -> vector<2x64xf32>
    %c0_93 = arith.constant 0 : index
    %c0_94 = arith.constant 0 : index
    %130 = vector.load %arg19[%c0_93, %c0_94] : memref<1x64xf32, #tpu.memory_space<vmem>>, vector<1x64xf32>
    %131 = vector.broadcast %130 : vector<1x64xf32> to vector<2x64xf32>
    %132 = arith.addf %129, %131 : vector<2x64xf32>
    %cst_95 = arith.constant 0.000000e+00 : f32
    %133 = vector.broadcast %cst_95 : f32 to vector<2x64xf32>
    %134 = arith.maximumf %132, %133 : vector<2x64xf32>
    %135 = arith.truncf %134 : vector<2x64xf32> to vector<2x64xbf16>
    %c0_96 = arith.constant 0 : index
    %c0_97 = arith.constant 0 : index
    %136 = vector.load %arg20[%c0_96, %c0_97] : memref<64x2xbf16, #tpu.memory_space<vmem>>, vector<64x2xbf16>
    %cst_98 = arith.constant dense<0.000000e+00> : vector<2x2xf32>
    %137 = tpu.matmul %135, %136, %cst_98 {dimension_numbers = #tpu.dot_dimension_numbers<[1], [0], [0], [1], [0, 0, 1, 1], [], []>} : vector<2x64xbf16>, vector<64x2xbf16>, vector<2x2xf32> -> vector<2x2xf32>
    %c0_99 = arith.constant 0 : index
    %c0_100 = arith.constant 0 : index
    %138 = vector.load %arg21[%c0_99, %c0_100] : memref<1x2xf32, #tpu.memory_space<vmem>>, vector<1x2xf32>
    %139 = vector.broadcast %138 : vector<1x2xf32> to vector<2x2xf32>
    %140 = arith.addf %137, %139 : vector<2x2xf32>
    %c0_101 = arith.constant 0 : index
    %c0_102 = arith.constant 0 : index
    %c0_103 = arith.constant 0 : index
    %141 = vector.load %arg22[%c0_101, %c0_102, %c0_103] : memref<1x2x2xf32, #tpu.memory_space<vmem>>, vector<1x2x2xf32>
    %142 = vector.shape_cast %141 : vector<1x2x2xf32> to vector<2x2xf32>
    %143 = vector.shape_cast %140 : vector<2x2xf32> to vector<1x2x2xf32>
    tpu.vector_store %arg22[%c0_101, %c0_102, %c0_103], %143 {strides = array<i32>} : memref<1x2x2xf32, #tpu.memory_space<vmem>>, vector<1x2x2xf32>,
    return
  }
  func.func @transform_0(%arg0: i32) -> (i32, i32, i32) {
    %c0_i32 = arith.constant 0 : i32
    %c0_i32_0 = arith.constant 0 : i32
    %c0_i32_1 = arith.constant 0 : i32
    return %arg0, %c0_i32, %c0_i32_0 : i32, i32, i32
  }
  func.func @transform_1(%arg0: i32) -> (i32, i32, i32) {
    %c0_i32 = arith.constant 0 : i32
    %c0_i32_0 = arith.constant 0 : i32
    %c0_i32_1 = arith.constant 0 : i32
    return %arg0, %c0_i32, %c0_i32_0 : i32, i32, i32
  }
  func.func @transform_2(%arg0: i32) -> (i32, i32, i32) {
    %c0_i32 = arith.constant 0 : i32
    %c0_i32_0 = arith.constant 0 : i32
    %c0_i32_1 = arith.constant 0 : i32
    %c0_i32_2 = arith.constant 0 : i32
    return %c0_i32, %c0_i32_0, %c0_i32_1 : i32, i32, i32
  }
  func.func @transform_3(%arg0: i32) -> (i32, i32) {
    %c0_i32 = arith.constant 0 : i32
    %c0_i32_0 = arith.constant 0 : i32
    %c0_i32_1 = arith.constant 0 : i32
    return %c0_i32, %c0_i32_0 : i32, i32
  }
  func.func @transform_4(%arg0: i32) -> (i32, i32, i32) {
    %c0_i32 = arith.constant 0 : i32
    %c0_i32_0 = arith.constant 0 : i32
    %c0_i32_1 = arith.constant 0 : i32
    %c0_i32_2 = arith.constant 0 : i32
    return %c0_i32, %c0_i32_0, %c0_i32_1 : i32, i32, i32
  }
  func.func @transform_5(%arg0: i32) -> (i32, i32) {
    %c0_i32 = arith.constant 0 : i32
    %c0_i32_0 = arith.constant 0 : i32
    %c0_i32_1 = arith.constant 0 : i32
    return %c0_i32, %c0_i32_0 : i32, i32
  }
  func.func @transform_6(%arg0: i32) -> (i32, i32, i32) {
    %c0_i32 = arith.constant 0 : i32
    %c0_i32_0 = arith.constant 0 : i32
    %c0_i32_1 = arith.constant 0 : i32
    %c0_i32_2 = arith.constant 0 : i32
    return %c0_i32, %c0_i32_0, %c0_i32_1 : i32, i32, i32
  }
  func.func @transform_7(%arg0: i32) -> (i32, i32) {
    %c0_i32 = arith.constant 0 : i32
    %c0_i32_0 = arith.constant 0 : i32
    %c0_i32_1 = arith.constant 0 : i32
    return %c0_i32, %c0_i32_0 : i32, i32
  }
  func.func @transform_8(%arg0: i32) -> (i32, i32, i32) {
    %c0_i32 = arith.constant 0 : i32
    %c0_i32_0 = arith.constant 0 : i32
    %c0_i32_1 = arith.constant 0 : i32
    %c0_i32_2 = arith.constant 0 : i32
    return %c0_i32, %c0_i32_0, %c0_i32_1 : i32, i32, i32
  }
  func.func @transform_9(%arg0: i32) -> (i32, i32) {
    %c0_i32 = arith.constant 0 : i32
    %c0_i32_0 = arith.constant 0 : i32
    %c0_i32_1 = arith.constant 0 : i32
    return %c0_i32, %c0_i32_0 : i32, i32
  }
  func.func @transform_10(%arg0: i32) -> (i32, i32) {
    %c0_i32 = arith.constant 0 : i32
    %c0_i32_0 = arith.constant 0 : i32
    %c0_i32_1 = arith.constant 0 : i32
    return %c0_i32, %c0_i32_0 : i32, i32
  }
  func.func @transform_11(%arg0: i32) -> (i32, i32) {
    %c0_i32 = arith.constant 0 : i32
    %c0_i32_0 = arith.constant 0 : i32
    %c0_i32_1 = arith.constant 0 : i32
    return %c0_i32, %c0_i32_0 : i32, i32
  }
  func.func @transform_12(%arg0: i32) -> (i32, i32) {
    %c0_i32 = arith.constant 0 : i32
    %c0_i32_0 = arith.constant 0 : i32
    %c0_i32_1 = arith.constant 0 : i32
    return %c0_i32, %c0_i32_0 : i32, i32
  }
  func.func @transform_13(%arg0: i32) -> (i32, i32) {
    %c0_i32 = arith.constant 0 : i32
    %c0_i32_0 = arith.constant 0 : i32
    %c0_i32_1 = arith.constant 0 : i32
    return %c0_i32, %c0_i32_0 : i32, i32
  }
  func.func @transform_14(%arg0: i32) -> (i32, i32) {
    %c0_i32 = arith.constant 0 : i32
    %c0_i32_0 = arith.constant 0 : i32
    %c0_i32_1 = arith.constant 0 : i32
    return %c0_i32, %c0_i32_0 : i32, i32
  }
  func.func @transform_15(%arg0: i32) -> (i32, i32) {
    %c0_i32 = arith.constant 0 : i32
    %c0_i32_0 = arith.constant 0 : i32
    %c0_i32_1 = arith.constant 0 : i32
    return %c0_i32, %c0_i32_0 : i32, i32
  }
  func.func @transform_16(%arg0: i32) -> (i32, i32) {
    %c0_i32 = arith.constant 0 : i32
    %c0_i32_0 = arith.constant 0 : i32
    %c0_i32_1 = arith.constant 0 : i32
    return %c0_i32, %c0_i32_0 : i32, i32
  }
  func.func @transform_17(%arg0: i32) -> (i32, i32) {
    %c0_i32 = arith.constant 0 : i32
    %c0_i32_0 = arith.constant 0 : i32
    %c0_i32_1 = arith.constant 0 : i32
    return %c0_i32, %c0_i32_0 : i32, i32
  }
  func.func @transform_18(%arg0: i32) -> (i32, i32) {
    %c0_i32 = arith.constant 0 : i32
    %c0_i32_0 = arith.constant 0 : i32
    %c0_i32_1 = arith.constant 0 : i32
    return %c0_i32, %c0_i32_0 : i32, i32
  }
  func.func @transform_19(%arg0: i32) -> (i32, i32) {
    %c0_i32 = arith.constant 0 : i32
    %c0_i32_0 = arith.constant 0 : i32
    %c0_i32_1 = arith.constant 0 : i32
    return %c0_i32, %c0_i32_0 : i32, i32
  }
  func.func @transform_20(%arg0: i32) -> (i32, i32) {
    %c0_i32 = arith.constant 0 : i32
    %c0_i32_0 = arith.constant 0 : i32
    %c0_i32_1 = arith.constant 0 : i32
    return %c0_i32, %c0_i32_0 : i32, i32
  }
  func.func @transform_21(%arg0: i32) -> (i32, i32, i32) {
    %c0_i32 = arith.constant 0 : i32
    %c0_i32_0 = arith.constant 0 : i32
    %c0_i32_1 = arith.constant 0 : i32
    return %arg0, %c0_i32, %c0_i32_0 : i32, i32, i32
  }
}

</mosaic_0001>

<llo_original>
// kernel: tile.19
$region0: #{tile.19}
  #allocation0 [shape = 's32[1]{0}', space=sflag, size = 0x4, scoped, tag = 'scoped memory for tile.19']
  %s0 = inlined_call_operand.vmem [shape: f32[32], index: 0, kind: input, shape index: {}]
  %s1 = inlined_call_operand.vmem [shape: f32[7,32], index: 1, kind: output, shape index: {}]
  // Predicated region
  $region2: #{tile.19} parent=0 // pred_check
    _
  $region3: #{tile.19} parent=0 // pred_check_branch
    %3 = sbr.rel (0) target = $region5
  $region4: #{tile.19} parent=0 // pred_region
    _
  $region5: #{tile.19} parent=0 // pred_fallthru
    _
  %v4 = vld [vmem:[%s0] ss:$0 sm:$0xff]
  %5 = vst [vmem:[%s1] sm:$0xff] %v4

// kernel: tile.20
$region0: #{tile.20}
  %s0 = inlined_call_operand.vmem [shape: f32[7,32], index: 0, kind: input, shape index: {}]
  %s1 = inlined_call_operand.vmem [shape: f32[1,224], index: 1, kind: output, shape index: {}]
  $region1: #{tile.20} parent=0
    #allocation0 [shape = 'u8[8192]{0}', space=vmem, size = 0x2000, scoped, tag = 'scoped mem for output reshape']
    %s2 = smov 3
    %v3 = vld [vmem:[%s0] ss:$4 sm:%s2]
    %vm4 = vcmask 261120
    %5 = vst.msk [vmem:[#allocation0] ss:$8 sm:$0x3] %vm4, %v3
    %s6 = scalar_lea.vmem %s0, 3
    %v7 = vld [vmem:[%s6] sm:$0x1]
    %8 = vrot.lane.b32.xlu0 %v7, 96
    %v9 = vpop.permute.xlu0 %8
    %vm10 = vcmask 1048320
    %11 = vst.msk [vmem:[#allocation0] sm:$0x1] %vm10, %v9
    %s12 = scalar_lea.vmem %s0, 2
    %s13 = smov 3
    %v14 = vld [vmem:[%s12] ss:$4 sm:%s13]
    %15 = vrot.lane.b32.xlu0 %v14, 64
    %v16 = vpop.permute.xlu0 %15
    %vm17 = vcmask 785920
    %18 = vst.msk [vmem:[#allocation0] ss:$8 sm:$0x3] %vm17, %v16
    %s19 = scalar_lea.vmem %s0, 1
    %s20 = smov 3
    %v21 = vld [vmem:[%s19] ss:$4 sm:%s20]
    %22 = vrot.lane.b32.xlu0 %v21, 32
    %v23 = vpop.permute.xlu0 %22
    %vm24 = vcmask 523520
    %25 = vst.msk [vmem:[#allocation0] ss:$8 sm:$0x3] %vm24, %v23
    %s27 = sshll.u32 1, 1
    %s28 = ssub.s32 %s27, 1
    %v30 = vld [vmem:[#allocation0] sm:%s28]
    %s31 = sshll.u32 1, 1
    %s32 = ssub.s32 %s31, 1
    %33 = vst [vmem:[%s1] sm:%s32] %v30
    %s34 = scalar_lea.vmem [#allocation0], 8
    %v35 = vld [vmem:[%s34] sm:%s28]
    %s36 = sshll.u32 1, 1
    %s37 = ssub.s32 %s36, 1
    %s38 = scalar_lea.vmem %s1, 1
    %39 = vst [vmem:[%s38] sm:%s37] %v35

// kernel: tile.24
$region0: #{tile.24}
  #allocation0 [shape = 's32[1]{0}', space=sflag, size = 0x4, scoped, tag = 'scoped memory for tile.24']
  %s0 = inlined_call_operand.vmem [shape: f32[32], index: 0, kind: input, shape index: {}]
  %s1 = inlined_call_operand.vmem [shape: f32[5,32], index: 1, kind: output, shape index: {}]
  // Predicated region
  $region2: #{tile.24} parent=0 // pred_check
    _
  $region3: #{tile.24} parent=0 // pred_check_branch
    %3 = sbr.rel (0) target = $region5
  $region4: #{tile.24} parent=0 // pred_region
    _
  $region5: #{tile.24} parent=0 // pred_fallthru
    _
  %v4 = vld [vmem:[%s0] ss:$0 sm:$0xff]
  %5 = vst [vmem:[%s1] sm:$0xff] %v4

// kernel: tile.25
$region0: #{tile.25}
  %s0 = inlined_call_operand.vmem [shape: f32[5,32], index: 0, kind: input, shape index: {}]
  %s1 = inlined_call_operand.vmem [shape: f32[1,160], index: 1, kind: output, shape index: {}]
  $region1: #{tile.25} parent=0
    #allocation0 [shape = 'u8[8192]{0}', space=vmem, size = 0x2000, scoped, tag = 'scoped mem for output reshape']
    %s2 = smov 3
    %v3 = vld [vmem:[%s0] ss:$4 sm:%s2]
    %vm4 = vcmask 261120
    %5 = vst.msk [vmem:[#allocation0] ss:$8 sm:$0x3] %vm4, %v3
    %s6 = scalar_lea.vmem %s0, 3
    %v7 = vld [vmem:[%s6] sm:$0x1]
    %8 = vrot.lane.b32.xlu0 %v7, 96
    %v9 = vpop.permute.xlu0 %8
    %vm10 = vcmask 1048320
    %11 = vst.msk [vmem:[#allocation0] sm:$0x1] %vm10, %v9
    %s12 = scalar_lea.vmem %s0, 2
    %v13 = vld [vmem:[%s12] sm:$0x1]
    %14 = vrot.lane.b32.xlu0 %v13, 64
    %v15 = vpop.permute.xlu0 %14
    %vm16 = vcmask 785920
    %17 = vst.msk [vmem:[#allocation0] sm:$0x1] %vm16, %v15
    %s18 = scalar_lea.vmem %s0, 1
    %v19 = vld [vmem:[%s18] sm:$0x1]
    %20 = vrot.lane.b32.xlu0 %v19, 32
    %v21 = vpop.permute.xlu0 %20
    %vm22 = vcmask 523520
    %23 = vst.msk [vmem:[#allocation0] sm:$0x1] %vm22, %v21
    %s25 = sshll.u32 1, 1
    %s26 = ssub.s32 %s25, 1
    %v28 = vld [vmem:[#allocation0] sm:%s26]
    %s29 = sshll.u32 1, 1
    %s30 = ssub.s32 %s29, 1
    %31 = vst [vmem:[%s1] sm:%s30] %v28
    %s32 = scalar_lea.vmem [#allocation0], 8
    %v33 = vld [vmem:[%s32] sm:%s26]
    %s34 = sshll.u32 1, 1
    %s35 = ssub.s32 %s34, 1
    %s36 = scalar_lea.vmem %s1, 1
    %37 = vst [vmem:[%s36] sm:%s35] %v33

// kernel: tile.29
$region0: #{tile.29}
  #allocation0 [shape = 's32[1]{0}', space=sflag, size = 0x4, scoped, tag = 'scoped memory for tile.29']
  %s0 = inlined_call_operand.vmem [shape: f32[32], index: 0, kind: input, shape index: {}]
  %s1 = inlined_call_operand.vmem [shape: f32[3,32], index: 1, kind: output, shape index: {}]
  // Predicated region
  $region2: #{tile.29} parent=0 // pred_check
    _
  $region3: #{tile.29} parent=0 // pred_check_branch
    %3 = sbr.rel (0) target = $region5
  $region4: #{tile.29} parent=0 // pred_region
    _
  $region5: #{tile.29} parent=0 // pred_fallthru
    _
  %v4 = vld [vmem:[%s0] ss:$0 sm:$0xff]
  %5 = vst [vmem:[%s1] sm:$0xf] %v4

// kernel: tile.30
$region0: #{tile.30}
  %s0 = inlined_call_operand.vmem [shape: f32[3,32], index: 0, kind: input, shape index: {}]
  %s1 = inlined_call_operand.vmem [shape: f32[1,96], index: 1, kind: output, shape index: {}]
  $region1: #{tile.30} parent=0
    #allocation0 [shape = 'u8[4096]{0}', space=vmem, size = 0x1000, scoped, tag = 'scoped mem for output reshape']
    #allocation1 [shape = 'u8[4096]{0}', space=vmem, size = 0x1000, scoped, tag = 'scoped mem for input reshape']
    %s3 = sshll.u32 1, 4
    %s4 = ssub.s32 %s3, 1
    %v5 = vld [vmem:[%s0] sm:%s4]
    %6 = vst [vmem:[#allocation1] sm:%s4] %v5
    %v7 = vld [vmem:[#allocation1] sm:$0x1]
    %vm8 = vcmask 261120
    %9 = vst.msk [vmem:[#allocation0] sm:$0x1] %vm8, %v7
    %s10 = scalar_lea.vmem [#allocation1], 2
    %v11 = vld [vmem:[%s10] sm:$0x1]
    %12 = vrot.lane.b32.xlu0 %v11, 64
    %v13 = vpop.permute.xlu0 %12
    %vm14 = vcmask 785920
    %15 = vst.msk [vmem:[#allocation0] sm:$0x1] %vm14, %v13
    %s16 = scalar_lea.vmem [#allocation1], 1
    %v17 = vld [vmem:[%s16] sm:$0x1]
    %18 = vrot.lane.b32.xlu0 %v17, 32
    %v19 = vpop.permute.xlu0 %18
    %vm20 = vcmask 523520
    %21 = vst.msk [vmem:[#allocation0] sm:$0x1] %vm20, %v19
    %s23 = sshll.u32 1, 1
    %s24 = ssub.s32 %s23, 1
    %v26 = vld [vmem:[#allocation0] sm:%s24]
    %s27 = sshll.u32 1, 1
    %s28 = ssub.s32 %s27, 1
    %29 = vst [vmem:[%s1] sm:%s28] %v26

// kernel: critic_forward.1
$region0: #{critic_forward.1}
  #allocation0 [shape = 'u32[]', space=smem, size = 0x4, offset = 0x4, fixed_abs, tag = 'smem constant byte address 0x4 - core index']
  #allocation1 [shape = 'u32[144,128]{1,0:T(1,128)}', space=vmem, size = 0x12000, scoped, tag = 'internal scratch']
  %s0 = inlined_call_operand.vmem [shape: bf16[1,32,64], index: 0, kind: input, shape index: {}]
  %s1 = inlined_call_operand.vmem [shape: f32[1,2,6], index: 1, kind: input, shape index: {}]
  %s2 = inlined_call_operand.vmem [shape: bf16[3,64,224], index: 2, kind: input, shape index: {}]
  %s3 = inlined_call_operand.vmem [shape: f32[1,224], index: 3, kind: input, shape index: {}]
  %s4 = inlined_call_operand.vmem [shape: bf16[3,224,160], index: 4, kind: input, shape index: {}]
  %s5 = inlined_call_operand.vmem [shape: f32[1,160], index: 5, kind: input, shape index: {}]
  %s6 = inlined_call_operand.vmem [shape: bf16[3,160,96], index: 6, kind: input, shape index: {}]
  %s7 = inlined_call_operand.vmem [shape: f32[1,96], index: 7, kind: input, shape index: {}]
  %s8 = inlined_call_operand.vmem [shape: bf16[3,96,32], index: 8, kind: input, shape index: {}]
  %s9 = inlined_call_operand.vmem [shape: f32[1,32], index: 9, kind: input, shape index: {}]
  %s10 = inlined_call_operand.vmem [shape: bf16[32,32], index: 10, kind: input, shape index: {}]
  %s11 = inlined_call_operand.vmem [shape: f32[1,32], index: 11, kind: input, shape index: {}]
  %s12 = inlined_call_operand.vmem [shape: f32[1,32], index: 12, kind: input, shape index: {}]
  %s13 = inlined_call_operand.vmem [shape: f32[1,32], index: 13, kind: input, shape index: {}]
  %s14 = inlined_call_operand.vmem [shape: bf16[32,64], index: 14, kind: input, shape index: {}]
  %s15 = inlined_call_operand.vmem [shape: bf16[6,64], index: 15, kind: input, shape index: {}]
  %s16 = inlined_call_operand.vmem [shape: f32[1,64], index: 16, kind: input, shape index: {}]
  %s17 = inlined_call_operand.vmem [shape: bf16[64,64], index: 17, kind: input, shape index: {}]
  %s18 = inlined_call_operand.vmem [shape: f32[1,64], index: 18, kind: input, shape index: {}]
  %s19 = inlined_call_operand.vmem [shape: bf16[64,2], index: 19, kind: input, shape index: {}]
  %s20 = inlined_call_operand.vmem [shape: f32[1,2], index: 20, kind: input, shape index: {}]
  %s21 = inlined_call_operand.vmem [shape: f32[1,2,2], index: 21, kind: output, shape index: {}]
  %s22 = sld [smem:[#allocation0]]
  $region94: #{critic_forward.1} parent=0
    _
  %s24 = ssub.s32 1, %s22
  %s25 = scalar_select 0, %s24, %s22
  // Predicated region
  $region2: #{critic_forward.1} parent=0 // pred_check
    _
  $region3: #{critic_forward.1} parent=0 // pred_check_branch
    %27 = sbr.rel (0) target = $region5
  $region4: #{critic_forward.1} parent=0 // pred_region
    _
  $region5: #{critic_forward.1} parent=0 // pred_fallthru
    _
  // Predicated region
  $region6: #{critic_forward.1} parent=0 // pred_check
    _
  $region7: #{critic_forward.1} parent=0 // pred_check_branch
    %29 = sbr.rel (0) target = $region9
  $region8: #{critic_forward.1} parent=0 // pred_region
    _
  $region9: #{critic_forward.1} parent=0 // pred_fallthru
    _
  // Predicated region
  $region10: #{critic_forward.1} parent=0 // pred_check
    _
  $region11: #{critic_forward.1} parent=0 // pred_check_branch
    %31 = sbr.rel (0) target = $region13
  $region12: #{critic_forward.1} parent=0 // pred_region
    _
  $region13: #{critic_forward.1} parent=0 // pred_fallthru
    _
  // Predicated region
  $region14: #{critic_forward.1} parent=0 // pred_check
    _
  $region15: #{critic_forward.1} parent=0 // pred_check_branch
    %33 = sbr.rel (0) target = $region17
  $region16: #{critic_forward.1} parent=0 // pred_region
    _
  $region17: #{critic_forward.1} parent=0 // pred_fallthru
    _
  // Predicated region
  $region18: #{critic_forward.1} parent=0 // pred_check
    _
  $region19: #{critic_forward.1} parent=0 // pred_check_branch
    %35 = sbr.rel (0) target = $region21
  $region20: #{critic_forward.1} parent=0 // pred_region
    _
  $region21: #{critic_forward.1} parent=0 // pred_fallthru
    _
  // Predicated region
  $region22: #{critic_forward.1} parent=0 // pred_check
    _
  $region23: #{critic_forward.1} parent=0 // pred_check_branch
    %37 = sbr.rel (0) target = $region25
  $region24: #{critic_forward.1} parent=0 // pred_region
    _
  $region25: #{critic_forward.1} parent=0 // pred_fallthru
    _
  // Predicated region
  $region26: #{critic_forward.1} parent=0 // pred_check
    _
  $region27: #{critic_forward.1} parent=0 // pred_check_branch
    %39 = sbr.rel (0) target = $region29
  $region28: #{critic_forward.1} parent=0 // pred_region
    _
  $region29: #{critic_forward.1} parent=0 // pred_fallthru
    _
  // Predicated region
  $region30: #{critic_forward.1} parent=0 // pred_check
    _
  $region31: #{critic_forward.1} parent=0 // pred_check_branch
    %41 = sbr.rel (0) target = $region33
  $region32: #{critic_forward.1} parent=0 // pred_region
    _
  $region33: #{critic_forward.1} parent=0 // pred_fallthru
    _
  // Predicated region
  $region34: #{critic_forward.1} parent=0 // pred_check
    _
  $region35: #{critic_forward.1} parent=0 // pred_check_branch
    %43 = sbr.rel (0) target = $region37
  $region36: #{critic_forward.1} parent=0 // pred_region
    _
  $region37: #{critic_forward.1} parent=0 // pred_fallthru
    _
  // Predicated region
  $region38: #{critic_forward.1} parent=0 // pred_check
    _
  $region39: #{critic_forward.1} parent=0 // pred_check_branch
    %45 = sbr.rel (0) target = $region41
  $region40: #{critic_forward.1} parent=0 // pred_region
    _
  $region41: #{critic_forward.1} parent=0 // pred_fallthru
    _
  // Predicated region
  $region42: #{critic_forward.1} parent=0 // pred_check
    _
  $region43: #{critic_forward.1} parent=0 // pred_check_branch
    %47 = sbr.rel (0) target = $region45
  $region44: #{critic_forward.1} parent=0 // pred_region
    _
  $region45: #{critic_forward.1} parent=0 // pred_fallthru
    _
  // Predicated region
  $region46: #{critic_forward.1} parent=0 // pred_check
    _
  $region47: #{critic_forward.1} parent=0 // pred_check_branch
    %49 = sbr.rel (0) target = $region49
  $region48: #{critic_forward.1} parent=0 // pred_region
    _
  $region49: #{critic_forward.1} parent=0 // pred_fallthru
    _
  // Predicated region
  $region50: #{critic_forward.1} parent=0 // pred_check
    _
  $region51: #{critic_forward.1} parent=0 // pred_check_branch
    %51 = sbr.rel (0) target = $region53
  $region52: #{critic_forward.1} parent=0 // pred_region
    _
  $region53: #{critic_forward.1} parent=0 // pred_fallthru
    _
  // Predicated region
  $region54: #{critic_forward.1} parent=0 // pred_check
    _
  $region55: #{critic_forward.1} parent=0 // pred_check_branch
    %53 = sbr.rel (0) target = $region57
  $region56: #{critic_forward.1} parent=0 // pred_region
    _
  $region57: #{critic_forward.1} parent=0 // pred_fallthru
    _
  // Predicated region
  $region58: #{critic_forward.1} parent=0 // pred_check
    _
  $region59: #{critic_forward.1} parent=0 // pred_check_branch
    %55 = sbr.rel (0) target = $region61
  $region60: #{critic_forward.1} parent=0 // pred_region
    _
  $region61: #{critic_forward.1} parent=0 // pred_fallthru
    _
  // Predicated region
  $region62: #{critic_forward.1} parent=0 // pred_check
    _
  $region63: #{critic_forward.1} parent=0 // pred_check_branch
    %57 = sbr.rel (0) target = $region65
  $region64: #{critic_forward.1} parent=0 // pred_region
    _
  $region65: #{critic_forward.1} parent=0 // pred_fallthru
    _
  // Predicated region
  $region66: #{critic_forward.1} parent=0 // pred_check
    _
  $region67: #{critic_forward.1} parent=0 // pred_check_branch
    %59 = sbr.rel (0) target = $region69
  $region68: #{critic_forward.1} parent=0 // pred_region
    _
  $region69: #{critic_forward.1} parent=0 // pred_fallthru
    _
  // Predicated region
  $region70: #{critic_forward.1} parent=0 // pred_check
    _
  $region71: #{critic_forward.1} parent=0 // pred_check_branch
    %61 = sbr.rel (0) target = $region73
  $region72: #{critic_forward.1} parent=0 // pred_region
    _
  $region73: #{critic_forward.1} parent=0 // pred_fallthru
    _
  // Predicated region
  $region74: #{critic_forward.1} parent=0 // pred_check
    _
  $region75: #{critic_forward.1} parent=0 // pred_check_branch
    %63 = sbr.rel (0) target = $region77
  $region76: #{critic_forward.1} parent=0 // pred_region
    _
  $region77: #{critic_forward.1} parent=0 // pred_fallthru
    _
  // Predicated region
  $region78: #{critic_forward.1} parent=0 // pred_check
    _
  $region79: #{critic_forward.1} parent=0 // pred_check_branch
    %65 = sbr.rel (0) target = $region81
  $region80: #{critic_forward.1} parent=0 // pred_region
    _
  $region81: #{critic_forward.1} parent=0 // pred_fallthru
    _
  // Predicated region
  $region82: #{critic_forward.1} parent=0 // pred_check
    _
  $region83: #{critic_forward.1} parent=0 // pred_check_branch
    %67 = sbr.rel (0) target = $region85
  $region84: #{critic_forward.1} parent=0 // pred_region
    _
  $region85: #{critic_forward.1} parent=0 // pred_fallthru
    _
  %v69 = vld [vmem:[%s0] sm:$0xf]
  %v70 = vld [vmem:[%s0 + $0x4] sm:$0x7]
  %v71 = vld [vmem:[%s2] sm:$0xff]
  %v72 = vld [vmem:[%s2 + $0x8] sm:$0xff]
  %v73 = vld [vmem:[%s2 + $0x10] sm:$0xff]
  %v74 = vld [vmem:[%s2 + $0x18] sm:$0xff]
  %v75 = vld [vmem:[%s2 + $0x20] sm:$0xff]
  %v76 = vld [vmem:[%s2 + $0x28] sm:$0xff]
  %v77 = vld [vmem:[%s2 + $0x30] sm:$0xff]
  %v78 = vld [vmem:[%s2 + $0x38] sm:$0xff]
  %v79 = vld [vmem:[%s0 + $0x8] sm:$0xf]
  %v80 = vld [vmem:[%s0 + $0xc] sm:$0x7]
  %s81 = scalar_lea.vmem %s2, 64
  %v82 = vld [vmem:[%s81] sm:$0xff]
  %v83 = vld [vmem:[%s81 + $0x8] sm:$0xff]
  %v84 = vld [vmem:[%s81 + $0x10] sm:$0xff]
  %v85 = vld [vmem:[%s81 + $0x18] sm:$0xff]
  %v86 = vld [vmem:[%s81 + $0x20] sm:$0xff]
  %v87 = vld [vmem:[%s81 + $0x28] sm:$0xff]
  %v88 = vld [vmem:[%s81 + $0x30] sm:$0xff]
  %v89 = vld [vmem:[%s81 + $0x38] sm:$0xff]
  %v92 = vunpack.c.l.b16 %v79
  %v93 = vunpack.c.l.b16 %v80
  %v94 = vpack.c.b16 %v93, %v92
  %v103 = vunpack.c.l.b16 %v82
  %v104 = vunpack.c.h.b16 %v82
  %v105 = vunpack.c.l.b16 %v83
  %v106 = vunpack.c.h.b16 %v83
  %v107 = vunpack.c.l.b16 %v84
  %v108 = vunpack.c.h.b16 %v84
  %v109 = vunpack.c.l.b16 %v85
  %v110 = vunpack.c.h.b16 %v85
  %v111 = vunpack.c.l.b16 %v86
  %v112 = vunpack.c.h.b16 %v86
  %v113 = vunpack.c.l.b16 %v87
  %v114 = vunpack.c.h.b16 %v87
  %v115 = vunpack.c.l.b16 %v88
  %v116 = vunpack.c.h.b16 %v88
  %v117 = vunpack.c.l.b16 %v89
  %v118 = vunpack.c.h.b16 %v89
  %v119 = vpack.c.b16 %v105, %v103
  %v120 = vpack.c.b16 %v106, %v104
  %v121 = vpack.c.b16 %v109, %v107
  %v122 = vpack.c.b16 %v110, %v108
  %v123 = vpack.c.b16 %v113, %v111
  %v124 = vpack.c.b16 %v114, %v112
  %v125 = vpack.c.b16 %v117, %v115
  %v126 = vpack.c.b16 %v118, %v116
  %vm135 = vcmask 523264
  %v137 = vsel %vm135, %v94, 0
  %139 = vmatprep.subr.bf16.mxu0 0
  %140 = vmatpush1.bf16.msra.mxu0 0
  %141 = vmatprep.subr.bf16.mxu0 0
  %142 = vmatpush1.bf16.msra.mxu0 0
  %143 = vmatprep.subr.bf16.mxu0 0
  %144 = vmatpush1.bf16.msra.mxu0 0
  %145 = vmatprep.subr.bf16.mxu0 0
  %146 = vmatpush1.bf16.msra.mxu0 0
  %147 = vmatprep.subr.bf16.mxu0 %v126
  %148 = vmatpush1.bf16.msra.mxu0 %v125
  %149 = vmatprep.subr.bf16.mxu0 %v124
  %150 = vmatpush1.bf16.msra.mxu0 %v123
  %151 = vmatprep.subr.bf16.mxu0 %v122
  %152 = vmatpush1.bf16.msra.mxu0 %v121
  %153 = vmatprep.subr.bf16.mxu0 %v120
  %154 = vmatpush1.bf16.msra.mxu0 %v119
  %155 = vmatprep.subr.bf16.mxu0 0
  %156 = vmatpush2.bf16.msra.mxu0 0
  %157 = vmatprep.subr.bf16.mxu0 0
  %158 = vmatpush2.bf16.msra.mxu0 0
  %159 = vmatprep.subr.bf16.mxu0 0
  %160 = vmatpush2.bf16.msra.mxu0 0
  %161 = vmatprep.subr.bf16.mxu0 0
  %162 = vmatpush2.bf16.msra.mxu0 0
  %163 = vmatprep.subr.bf16.mxu0 0
  %164 = vmatpush2.bf16.msra.mxu0 0
  %165 = vmatprep.subr.bf16.mxu0 0
  %166 = vmatpush2.bf16.msra.mxu0 0
  %167 = vmatprep.subr.bf16.mxu0 0
  %168 = vmatpush2.bf16.msra.mxu0 0
  %169 = vmatprep.subr.bf16.mxu0 0
  %170 = vmatpush2.bf16.msra.mxu0 0
  %171 = vmatprep.mubr.bf16.mxu0 0
  %172 = vmatmul.mubr.bf16.gmra.mxu0 %v137
  %v173 = vpop.f32.mrf.mxu0
  %v174 = vadd.f32 0.0, %v173
  %v175 = vpop.f32.mrf.mxu0
  %v176 = vadd.f32 0.0, %v175
  %v177 = vpop.f32.mrf.mxu0
  %v178 = vadd.f32 0.0, %v177
  %v179 = vpop.f32.mrf.mxu0
  %v180 = vadd.f32 0.0, %v179
  %181 = vdwg.mxu0
  %v184 = vunpack.c.l.b16 %v69
  %v185 = vunpack.c.l.b16 %v70
  %v186 = vpack.c.b16 %v185, %v184
  %v195 = vunpack.c.l.b16 %v71
  %v196 = vunpack.c.h.b16 %v71
  %v197 = vunpack.c.l.b16 %v72
  %v198 = vunpack.c.h.b16 %v72
  %v199 = vunpack.c.l.b16 %v73
  %v200 = vunpack.c.h.b16 %v73
  %v201 = vunpack.c.l.b16 %v74
  %v202 = vunpack.c.h.b16 %v74
  %v203 = vunpack.c.l.b16 %v75
  %v204 = vunpack.c.h.b16 %v75
  %v205 = vunpack.c.l.b16 %v76
  %v206 = vunpack.c.h.b16 %v76
  %v207 = vunpack.c.l.b16 %v77
  %v208 = vunpack.c.h.b16 %v77
  %v209 = vunpack.c.l.b16 %v78
  %v210 = vunpack.c.h.b16 %v78
  %v211 = vpack.c.b16 %v197, %v195
  %v212 = vpack.c.b16 %v198, %v196
  %v213 = vpack.c.b16 %v201, %v199
  %v214 = vpack.c.b16 %v202, %v200
  %v215 = vpack.c.b16 %v205, %v203
  %v216 = vpack.c.b16 %v206, %v204
  %v217 = vpack.c.b16 %v209, %v207
  %v218 = vpack.c.b16 %v210, %v208
  %v228 = vsel %vm135, %v186, 0
  %230 = vmatprep.subr.bf16.mxu0 0
  %231 = vmatpush1.bf16.msra.mxu0 0
  %232 = vmatprep.subr.bf16.mxu0 0
  %233 = vmatpush1.bf16.msra.mxu0 0
  %234 = vmatprep.subr.bf16.mxu0 0
  %235 = vmatpush1.bf16.msra.mxu0 0
  %236 = vmatprep.subr.bf16.mxu0 0
  %237 = vmatpush1.bf16.msra.mxu0 0
  %238 = vmatprep.subr.bf16.mxu0 %v218
  %239 = vmatpush1.bf16.msra.mxu0 %v217
  %240 = vmatprep.subr.bf16.mxu0 %v216
  %241 = vmatpush1.bf16.msra.mxu0 %v215
  %242 = vmatprep.subr.bf16.mxu0 %v214
  %243 = vmatpush1.bf16.msra.mxu0 %v213
  %244 = vmatprep.subr.bf16.mxu0 %v212
  %245 = vmatpush1.bf16.msra.mxu0 %v211
  %246 = vmatprep.subr.bf16.mxu0 0
  %247 = vmatpush2.bf16.msra.mxu0 0
  %248 = vmatprep.subr.bf16.mxu0 0
  %249 = vmatpush2.bf16.msra.mxu0 0
  %250 = vmatprep.subr.bf16.mxu0 0
  %251 = vmatpush2.bf16.msra.mxu0 0
  %252 = vmatprep.subr.bf16.mxu0 0
  %253 = vmatpush2.bf16.msra.mxu0 0
  %254 = vmatprep.subr.bf16.mxu0 0
  %255 = vmatpush2.bf16.msra.mxu0 0
  %256 = vmatprep.subr.bf16.mxu0 0
  %257 = vmatpush2.bf16.msra.mxu0 0
  %258 = vmatprep.subr.bf16.mxu0 0
  %259 = vmatpush2.bf16.msra.mxu0 0
  %260 = vmatprep.subr.bf16.mxu0 0
  %261 = vmatpush2.bf16.msra.mxu0 0
  %262 = vmatprep.mubr.bf16.mxu0 0
  %263 = vmatmul.mubr.bf16.gmra.mxu0 %v228
  %v264 = vpop.f32.mrf.mxu0
  %v265 = vadd.f32 %v174, %v264
  %v266 = vpop.f32.mrf.mxu0
  %v267 = vadd.f32 %v176, %v266
  %v268 = vpop.f32.mrf.mxu0
  %v269 = vadd.f32 %v178, %v268
  %v270 = vpop.f32.mrf.mxu0
  %v271 = vadd.f32 %v180, %v270
  %272 = vdwg.mxu0
  %v273 = vld [vmem:[%s0] sm:$0xe]
  %v274 = vld [vmem:[%s0 + $0x4] sm:$0xf]
  %s275 = scalar_lea.vmem %s2, 128
  %v276 = vld [vmem:[%s275] sm:$0xff]
  %v277 = vld [vmem:[%s275 + $0x8] sm:$0xff]
  %v278 = vld [vmem:[%s275 + $0x10] sm:$0xff]
  %v279 = vld [vmem:[%s275 + $0x18] sm:$0xff]
  %v280 = vld [vmem:[%s275 + $0x20] sm:$0xff]
  %v281 = vld [vmem:[%s275 + $0x28] sm:$0xff]
  %v282 = vld [vmem:[%s275 + $0x30] sm:$0xff]
  %v283 = vld [vmem:[%s275 + $0x38] sm:$0xff]
  %v286 = vunpack.c.l.b16 %v273
  %v287 = vunpack.c.l.b16 %v274
  %v288 = vpack.c.b16 %v287, %v286
  %v289 = vrot.slane %v288, 1
  %v298 = vunpack.c.l.b16 %v276
  %v299 = vunpack.c.h.b16 %v276
  %v300 = vunpack.c.l.b16 %v277
  %v301 = vunpack.c.h.b16 %v277
  %v302 = vunpack.c.l.b16 %v278
  %v303 = vunpack.c.h.b16 %v278
  %v304 = vunpack.c.l.b16 %v279
  %v305 = vunpack.c.h.b16 %v279
  %v306 = vunpack.c.l.b16 %v280
  %v307 = vunpack.c.h.b16 %v280
  %v308 = vunpack.c.l.b16 %v281
  %v309 = vunpack.c.h.b16 %v281
  %v310 = vunpack.c.l.b16 %v282
  %v311 = vunpack.c.h.b16 %v282
  %v312 = vunpack.c.l.b16 %v283
  %v313 = vunpack.c.h.b16 %v283
  %v314 = vpack.c.b16 %v300, %v298
  %v315 = vpack.c.b16 %v301, %v299
  %v316 = vpack.c.b16 %v304, %v302
  %v317 = vpack.c.b16 %v305, %v303
  %v318 = vpack.c.b16 %v308, %v306
  %v319 = vpack.c.b16 %v309, %v307
  %v320 = vpack.c.b16 %v312, %v310
  %v321 = vpack.c.b16 %v313, %v311
  %v331 = vsel %vm135, %v289, 0
  %333 = vmatprep.subr.bf16.mxu0 0
  %334 = vmatpush1.bf16.msra.mxu0 0
  %335 = vmatprep.subr.bf16.mxu0 0
  %336 = vmatpush1.bf16.msra.mxu0 0
  %337 = vmatprep.subr.bf16.mxu0 0
  %338 = vmatpush1.bf16.msra.mxu0 0
  %339 = vmatprep.subr.bf16.mxu0 0
  %340 = vmatpush1.bf16.msra.mxu0 0
  %341 = vmatprep.subr.bf16.mxu0 %v321
  %342 = vmatpush1.bf16.msra.mxu0 %v320
  %343 = vmatprep.subr.bf16.mxu0 %v319
  %344 = vmatpush1.bf16.msra.mxu0 %v318
  %345 = vmatprep.subr.bf16.mxu0 %v317
  %346 = vmatpush1.bf16.msra.mxu0 %v316
  %347 = vmatprep.subr.bf16.mxu0 %v315
  %348 = vmatpush1.bf16.msra.mxu0 %v314
  %349 = vmatprep.subr.bf16.mxu0 0
  %350 = vmatpush2.bf16.msra.mxu0 0
  %351 = vmatprep.subr.bf16.mxu0 0
  %352 = vmatpush2.bf16.msra.mxu0 0
  %353 = vmatprep.subr.bf16.mxu0 0
  %354 = vmatpush2.bf16.msra.mxu0 0
  %355 = vmatprep.subr.bf16.mxu0 0
  %356 = vmatpush2.bf16.msra.mxu0 0
  %357 = vmatprep.subr.bf16.mxu0 0
  %358 = vmatpush2.bf16.msra.mxu0 0
  %359 = vmatprep.subr.bf16.mxu0 0
  %360 = vmatpush2.bf16.msra.mxu0 0
  %361 = vmatprep.subr.bf16.mxu0 0
  %362 = vmatpush2.bf16.msra.mxu0 0
  %363 = vmatprep.subr.bf16.mxu0 0
  %364 = vmatpush2.bf16.msra.mxu0 0
  %365 = vmatprep.mubr.bf16.mxu0 0
  %366 = vmatmul.mubr.bf16.gmra.mxu0 %v331
  %v367 = vpop.f32.mrf.mxu0
  %v368 = vadd.f32 0.0, %v367
  %v369 = vpop.f32.mrf.mxu0
  %v370 = vadd.f32 0.0, %v369
  %v371 = vpop.f32.mrf.mxu0
  %v372 = vadd.f32 0.0, %v371
  %v373 = vpop.f32.mrf.mxu0
  %v374 = vadd.f32 0.0, %v373
  %375 = vdwg.mxu0
  %v376 = vadd.f32 %v265, %v368
  %v377 = vadd.f32 %v267, %v370
  %v378 = vadd.f32 %v269, %v372
  %v379 = vadd.f32 %v271, %v374
  %v380 = vld [vmem:[%s3] sm:$0x3]
  %v382 = vlaneseq
  %v383 = vshrl.u32 %v382, 7
  %v384 = vsub.s32 0, %v383
  %v385 = vrot.slane %v380, %v384
  %v386 = vlaneseq
  %v387 = vshrl.u32 %v386, 7
  %v388 = vsub.s32 1, %v387
  %v389 = vrot.slane %v380, %v388
  %v392 = vadd.f32 %v376, %v385
  %v393 = vadd.f32 %v377, %v389
  %v394 = vadd.f32 %v378, %v385
  %v395 = vadd.f32 %v379, %v389
  %v396 = vmax.f32 %v392, 0.0
  %v397 = vmax.f32 %v393, 0.0
  %v398 = vmax.f32 %v394, 0.0
  %v399 = vmax.f32 %v395, 0.0
  %v400 = vpack.c.bf16 %v398, %v396
  %v401 = vpack.c.bf16 %v399, %v397
  %v402 = vld [vmem:[%s4] sm:$0xff]
  %v403 = vld [vmem:[%s4 + $0x8] sm:$0xff]
  %v404 = vld [vmem:[%s4 + $0x10] sm:$0xff]
  %v405 = vld [vmem:[%s4 + $0x18] sm:$0xff]
  %v406 = vld [vmem:[%s4 + $0x20] sm:$0xff]
  %v407 = vld [vmem:[%s4 + $0x28] sm:$0xff]
  %v408 = vld [vmem:[%s4 + $0x30] sm:$0xff]
  %v409 = vld [vmem:[%s4 + $0x38] sm:$0xff]
  %v410 = vld [vmem:[%s4 + $0x40] sm:$0xff]
  %v411 = vld [vmem:[%s4 + $0x48] sm:$0xff]
  %v412 = vld [vmem:[%s4 + $0x50] sm:$0xff]
  %v413 = vld [vmem:[%s4 + $0x58] sm:$0xff]
  %v414 = vld [vmem:[%s4 + $0x60] sm:$0xff]
  %v415 = vld [vmem:[%s4 + $0x68] sm:$0xff]
  %v416 = vld [vmem:[%s4 + $0x70] sm:$0xff]
  %v417 = vld [vmem:[%s4 + $0x78] sm:$0xff]
  %v418 = vld [vmem:[%s4 + $0x80] sm:$0xff]
  %v419 = vld [vmem:[%s4 + $0x88] sm:$0xff]
  %v420 = vld [vmem:[%s4 + $0x90] sm:$0xff]
  %v421 = vld [vmem:[%s4 + $0x98] sm:$0xff]
  %v422 = vld [vmem:[%s4 + $0xa0] sm:$0xff]
  %v423 = vld [vmem:[%s4 + $0xa8] sm:$0xff]
  %v424 = vld [vmem:[%s4 + $0xb0] sm:$0xff]
  %v425 = vld [vmem:[%s4 + $0xb8] sm:$0xff]
  %v426 = vld [vmem:[%s4 + $0xc0] sm:$0xff]
  %v427 = vld [vmem:[%s4 + $0xc8] sm:$0xff]
  %v428 = vld [vmem:[%s4 + $0xd0] sm:$0xff]
  %v429 = vld [vmem:[%s4 + $0xd8] sm:$0xff]
  %s430 = scalar_lea.vmem %s4, 224
  %v431 = vld [vmem:[%s430] sm:$0xff]
  %v432 = vld [vmem:[%s430 + $0x8] sm:$0xff]
  %v433 = vld [vmem:[%s430 + $0x10] sm:$0xff]
  %v434 = vld [vmem:[%s430 + $0x18] sm:$0xff]
  %v435 = vld [vmem:[%s430 + $0x20] sm:$0xff]
  %v436 = vld [vmem:[%s430 + $0x28] sm:$0xff]
  %v437 = vld [vmem:[%s430 + $0x30] sm:$0xff]
  %v438 = vld [vmem:[%s430 + $0x38] sm:$0xff]
  %v439 = vld [vmem:[%s430 + $0x40] sm:$0xff]
  %v440 = vld [vmem:[%s430 + $0x48] sm:$0xff]
  %v441 = vld [vmem:[%s430 + $0x50] sm:$0xff]
  %v442 = vld [vmem:[%s430 + $0x58] sm:$0xff]
  %v443 = vld [vmem:[%s430 + $0x60] sm:$0xff]
  %v444 = vld [vmem:[%s430 + $0x68] sm:$0xff]
  %v445 = vld [vmem:[%s430 + $0x70] sm:$0xff]
  %v446 = vld [vmem:[%s430 + $0x78] sm:$0xff]
  %v447 = vld [vmem:[%s430 + $0x80] sm:$0xff]
  %v448 = vld [vmem:[%s430 + $0x88] sm:$0xff]
  %v449 = vld [vmem:[%s430 + $0x90] sm:$0xff]
  %v450 = vld [vmem:[%s430 + $0x98] sm:$0xff]
  %v451 = vld [vmem:[%s430 + $0xa0] sm:$0xff]
  %v452 = vld [vmem:[%s430 + $0xa8] sm:$0xff]
  %v453 = vld [vmem:[%s430 + $0xb0] sm:$0xff]
  %v454 = vld [vmem:[%s430 + $0xb8] sm:$0xff]
  %v455 = vld [vmem:[%s430 + $0xc0] sm:$0xff]
  %v456 = vld [vmem:[%s430 + $0xc8] sm:$0xff]
  %v457 = vld [vmem:[%s430 + $0xd0] sm:$0xff]
  %v458 = vld [vmem:[%s430 + $0xd8] sm:$0xff]
  %v461 = vrot.slane %v400, 1
  %v462 = vrot.slane %v401, 1
  %v492 = vunpack.c.l.b16 %v431
  %v493 = vunpack.c.h.b16 %v431
  %v494 = vunpack.c.l.b16 %v432
  %v495 = vunpack.c.h.b16 %v432
  %v496 = vunpack.c.l.b16 %v433
  %v497 = vunpack.c.h.b16 %v433
  %v498 = vunpack.c.l.b16 %v434
  %v499 = vunpack.c.h.b16 %v434
  %v500 = vunpack.c.l.b16 %v435
  %v501 = vunpack.c.h.b16 %v435
  %v502 = vunpack.c.l.b16 %v436
  %v503 = vunpack.c.h.b16 %v436
  %v504 = vunpack.c.l.b16 %v437
  %v505 = vunpack.c.h.b16 %v437
  %v506 = vunpack.c.l.b16 %v438
  %v507 = vunpack.c.h.b16 %v438
  %v508 = vunpack.c.l.b16 %v439
  %v509 = vunpack.c.h.b16 %v439
  %v510 = vunpack.c.l.b16 %v440
  %v511 = vunpack.c.h.b16 %v440
  %v512 = vunpack.c.l.b16 %v441
  %v513 = vunpack.c.h.b16 %v441
  %v514 = vunpack.c.l.b16 %v442
  %v515 = vunpack.c.h.b16 %v442
  %v516 = vunpack.c.l.b16 %v443
  %v517 = vunpack.c.h.b16 %v443
  %v518 = vunpack.c.l.b16 %v444
  %v519 = vunpack.c.h.b16 %v444
  %v520 = vunpack.c.l.b16 %v445
  %v521 = vunpack.c.h.b16 %v445
  %v522 = vunpack.c.l.b16 %v446
  %v523 = vunpack.c.h.b16 %v446
  %v524 = vunpack.c.l.b16 %v447
  %v525 = vunpack.c.h.b16 %v447
  %v526 = vunpack.c.l.b16 %v448
  %v527 = vunpack.c.h.b16 %v448
  %v528 = vunpack.c.l.b16 %v449
  %v529 = vunpack.c.h.b16 %v449
  %v530 = vunpack.c.l.b16 %v450
  %v531 = vunpack.c.h.b16 %v450
  %v532 = vunpack.c.l.b16 %v451
  %v533 = vunpack.c.h.b16 %v451
  %v534 = vunpack.c.l.b16 %v452
  %v535 = vunpack.c.h.b16 %v452
  %v536 = vunpack.c.l.b16 %v453
  %v537 = vunpack.c.h.b16 %v453
  %v538 = vunpack.c.l.b16 %v454
  %v539 = vunpack.c.h.b16 %v454
  %v540 = vunpack.c.l.b16 %v455
  %v541 = vunpack.c.h.b16 %v455
  %v542 = vunpack.c.l.b16 %v456
  %v543 = vunpack.c.h.b16 %v456
  %v544 = vunpack.c.l.b16 %v457
  %v545 = vunpack.c.h.b16 %v457
  %v546 = vunpack.c.l.b16 %v458
  %v547 = vunpack.c.h.b16 %v458
  %v548 = vpack.c.b16 %v494, %v492
  %v549 = vpack.c.b16 %v495, %v493
  %v550 = vpack.c.b16 %v498, %v496
  %v551 = vpack.c.b16 %v499, %v497
  %v552 = vpack.c.b16 %v502, %v500
  %v553 = vpack.c.b16 %v503, %v501
  %v554 = vpack.c.b16 %v506, %v504
  %v555 = vpack.c.b16 %v507, %v505
  %v556 = vpack.c.b16 %v510, %v508
  %v557 = vpack.c.b16 %v511, %v509
  %v558 = vpack.c.b16 %v514, %v512
  %v559 = vpack.c.b16 %v515, %v513
  %v560 = vpack.c.b16 %v518, %v516
  %v561 = vpack.c.b16 %v519, %v517
  %v562 = vpack.c.b16 %v522, %v520
  %v563 = vpack.c.b16 %v523, %v521
  %v564 = vpack.c.b16 %v526, %v524
  %v565 = vpack.c.b16 %v527, %v525
  %v566 = vpack.c.b16 %v530, %v528
  %v567 = vpack.c.b16 %v531, %v529
  %v568 = vpack.c.b16 %v534, %v532
  %v569 = vpack.c.b16 %v535, %v533
  %v570 = vpack.c.b16 %v538, %v536
  %v571 = vpack.c.b16 %v539, %v537
  %v572 = vpack.c.b16 %v542, %v540
  %v573 = vpack.c.b16 %v543, %v541
  %v574 = vpack.c.b16 %v546, %v544
  %v575 = vpack.c.b16 %v547, %v545
  %vm604 = vcmask 785408
  %v606 = vsel %vm604, %v462, 0
  %608 = vmatprep.subr.bf16.mxu0 %v563
  %609 = vmatpush1.bf16.msra.mxu0 %v562
  %610 = vmatprep.subr.bf16.mxu0 %v561
  %611 = vmatpush1.bf16.msra.mxu0 %v560
  %612 = vmatprep.subr.bf16.mxu0 %v559
  %613 = vmatpush1.bf16.msra.mxu0 %v558
  %614 = vmatprep.subr.bf16.mxu0 %v557
  %615 = vmatpush1.bf16.msra.mxu0 %v556
  %616 = vmatprep.subr.bf16.mxu0 %v555
  %617 = vmatpush1.bf16.msra.mxu0 %v554
  %618 = vmatprep.subr.bf16.mxu0 %v553
  %619 = vmatpush1.bf16.msra.mxu0 %v552
  %620 = vmatprep.subr.bf16.mxu0 %v551
  %621 = vmatpush1.bf16.msra.mxu0 %v550
  %622 = vmatprep.subr.bf16.mxu0 %v549
  %623 = vmatpush1.bf16.msra.mxu0 %v548
  %624 = vmatprep.subr.bf16.mxu0 0
  %625 = vmatpush2.bf16.msra.mxu0 0
  %626 = vmatprep.subr.bf16.mxu0 0
  %627 = vmatpush2.bf16.msra.mxu0 0
  %628 = vmatprep.subr.bf16.mxu0 %v575
  %629 = vmatpush2.bf16.msra.mxu0 %v574
  %630 = vmatprep.subr.bf16.mxu0 %v573
  %631 = vmatpush2.bf16.msra.mxu0 %v572
  %632 = vmatprep.subr.bf16.mxu0 %v571
  %633 = vmatpush2.bf16.msra.mxu0 %v570
  %634 = vmatprep.subr.bf16.mxu0 %v569
  %635 = vmatpush2.bf16.msra.mxu0 %v568
  %636 = vmatprep.subr.bf16.mxu0 %v567
  %637 = vmatpush2.bf16.msra.mxu0 %v566
  %638 = vmatprep.subr.bf16.mxu0 %v565
  %639 = vmatpush2.bf16.msra.mxu0 %v564
  %640 = vmatprep.mubr.bf16.mxu0 %v606
  %641 = vmatmul.mubr.bf16.gmra.mxu0 %v461
  %v642 = vpop.f32.mrf.mxu0
  %v643 = vadd.f32 0.0, %v642
  %v644 = vpop.f32.mrf.mxu0
  %v645 = vadd.f32 0.0, %v644
  %v646 = vpop.f32.mrf.mxu0
  %v647 = vadd.f32 0.0, %v646
  %v648 = vpop.f32.mrf.mxu0
  %v649 = vadd.f32 0.0, %v648
  %650 = vdwg.mxu0
  %v679 = vunpack.c.l.b16 %v402
  %v680 = vunpack.c.h.b16 %v402
  %v681 = vunpack.c.l.b16 %v403
  %v682 = vunpack.c.h.b16 %v403
  %v683 = vunpack.c.l.b16 %v404
  %v684 = vunpack.c.h.b16 %v404
  %v685 = vunpack.c.l.b16 %v405
  %v686 = vunpack.c.h.b16 %v405
  %v687 = vunpack.c.l.b16 %v406
  %v688 = vunpack.c.h.b16 %v406
  %v689 = vunpack.c.l.b16 %v407
  %v690 = vunpack.c.h.b16 %v407
  %v691 = vunpack.c.l.b16 %v408
  %v692 = vunpack.c.h.b16 %v408
  %v693 = vunpack.c.l.b16 %v409
  %v694 = vunpack.c.h.b16 %v409
  %v695 = vunpack.c.l.b16 %v410
  %v696 = vunpack.c.h.b16 %v410
  %v697 = vunpack.c.l.b16 %v411
  %v698 = vunpack.c.h.b16 %v411
  %v699 = vunpack.c.l.b16 %v412
  %v700 = vunpack.c.h.b16 %v412
  %v701 = vunpack.c.l.b16 %v413
  %v702 = vunpack.c.h.b16 %v413
  %v703 = vunpack.c.l.b16 %v414
  %v704 = vunpack.c.h.b16 %v414
  %v705 = vunpack.c.l.b16 %v415
  %v706 = vunpack.c.h.b16 %v415
  %v707 = vunpack.c.l.b16 %v416
  %v708 = vunpack.c.h.b16 %v416
  %v709 = vunpack.c.l.b16 %v417
  %v710 = vunpack.c.h.b16 %v417
  %v711 = vunpack.c.l.b16 %v418
  %v712 = vunpack.c.h.b16 %v418
  %v713 = vunpack.c.l.b16 %v419
  %v714 = vunpack.c.h.b16 %v419
  %v715 = vunpack.c.l.b16 %v420
  %v716 = vunpack.c.h.b16 %v420
  %v717 = vunpack.c.l.b16 %v421
  %v718 = vunpack.c.h.b16 %v421
  %v719 = vunpack.c.l.b16 %v422
  %v720 = vunpack.c.h.b16 %v422
  %v721 = vunpack.c.l.b16 %v423
  %v722 = vunpack.c.h.b16 %v423
  %v723 = vunpack.c.l.b16 %v424
  %v724 = vunpack.c.h.b16 %v424
  %v725 = vunpack.c.l.b16 %v425
  %v726 = vunpack.c.h.b16 %v425
  %v727 = vunpack.c.l.b16 %v426
  %v728 = vunpack.c.h.b16 %v426
  %v729 = vunpack.c.l.b16 %v427
  %v730 = vunpack.c.h.b16 %v427
  %v731 = vunpack.c.l.b16 %v428
  %v732 = vunpack.c.h.b16 %v428
  %v733 = vunpack.c.l.b16 %v429
  %v734 = vunpack.c.h.b16 %v429
  %v735 = vpack.c.b16 %v681, %v679
  %v736 = vpack.c.b16 %v682, %v680
  %v737 = vpack.c.b16 %v685, %v683
  %v738 = vpack.c.b16 %v686, %v684
  %v739 = vpack.c.b16 %v689, %v687
  %v740 = vpack.c.b16 %v690, %v688
  %v741 = vpack.c.b16 %v693, %v691
  %v742 = vpack.c.b16 %v694, %v692
  %v743 = vpack.c.b16 %v697, %v695
  %v744 = vpack.c.b16 %v698, %v696
  %v745 = vpack.c.b16 %v701, %v699
  %v746 = vpack.c.b16 %v702, %v700
  %v747 = vpack.c.b16 %v705, %v703
  %v748 = vpack.c.b16 %v706, %v704
  %v749 = vpack.c.b16 %v709, %v707
  %v750 = vpack.c.b16 %v710, %v708
  %v751 = vpack.c.b16 %v713, %v711
  %v752 = vpack.c.b16 %v714, %v712
  %v753 = vpack.c.b16 %v717, %v715
  %v754 = vpack.c.b16 %v718, %v716
  %v755 = vpack.c.b16 %v721, %v719
  %v756 = vpack.c.b16 %v722, %v720
  %v757 = vpack.c.b16 %v725, %v723
  %v758 = vpack.c.b16 %v726, %v724
  %v759 = vpack.c.b16 %v729, %v727
  %v760 = vpack.c.b16 %v730, %v728
  %v761 = vpack.c.b16 %v733, %v731
  %v762 = vpack.c.b16 %v734, %v732
  %v792 = vsel %vm604, %v401, 0
  %794 = vmatprep.subr.bf16.mxu0 %v750
  %795 = vmatpush1.bf16.msra.mxu0 %v749
  %796 = vmatprep.subr.bf16.mxu0 %v748
  %797 = vmatpush1.bf16.msra.mxu0 %v747
  %798 = vmatprep.subr.bf16.mxu0 %v746
  %799 = vmatpush1.bf16.msra.mxu0 %v745
  %800 = vmatprep.subr.bf16.mxu0 %v744
  %801 = vmatpush1.bf16.msra.mxu0 %v743
  %802 = vmatprep.subr.bf16.mxu0 %v742
  %803 = vmatpush1.bf16.msra.mxu0 %v741
  %804 = vmatprep.subr.bf16.mxu0 %v740
  %805 = vmatpush1.bf16.msra.mxu0 %v739
  %806 = vmatprep.subr.bf16.mxu0 %v738
  %807 = vmatpush1.bf16.msra.mxu0 %v737
  %808 = vmatprep.subr.bf16.mxu0 %v736
  %809 = vmatpush1.bf16.msra.mxu0 %v735
  %810 = vmatprep.subr.bf16.mxu0 0
  %811 = vmatpush2.bf16.msra.mxu0 0
  %812 = vmatprep.subr.bf16.mxu0 0
  %813 = vmatpush2.bf16.msra.mxu0 0
  %814 = vmatprep.subr.bf16.mxu0 %v762
  %815 = vmatpush2.bf16.msra.mxu0 %v761
  %816 = vmatprep.subr.bf16.mxu0 %v760
  %817 = vmatpush2.bf16.msra.mxu0 %v759
  %818 = vmatprep.subr.bf16.mxu0 %v758
  %819 = vmatpush2.bf16.msra.mxu0 %v757
  %820 = vmatprep.subr.bf16.mxu0 %v756
  %821 = vmatpush2.bf16.msra.mxu0 %v755
  %822 = vmatprep.subr.bf16.mxu0 %v754
  %823 = vmatpush2.bf16.msra.mxu0 %v753
  %824 = vmatprep.subr.bf16.mxu0 %v752
  %825 = vmatpush2.bf16.msra.mxu0 %v751
  %826 = vmatprep.mubr.bf16.mxu0 %v792
  %827 = vmatmul.mubr.bf16.gmra.mxu0 %v400
  %v828 = vpop.f32.mrf.mxu0
  %v829 = vadd.f32 %v643, %v828
  %v830 = vpop.f32.mrf.mxu0
  %v831 = vadd.f32 %v645, %v830
  %v832 = vpop.f32.mrf.mxu0
  %v833 = vadd.f32 %v647, %v832
  %v834 = vpop.f32.mrf.mxu0
  %v835 = vadd.f32 %v649, %v834
  %836 = vdwg.mxu0
  %s837 = scalar_lea.vmem %s4, 448
  %v838 = vld [vmem:[%s837] sm:$0xff]
  %v839 = vld [vmem:[%s837 + $0x8] sm:$0xff]
  %v840 = vld [vmem:[%s837 + $0x10] sm:$0xff]
  %v841 = vld [vmem:[%s837 + $0x18] sm:$0xff]
  %v842 = vld [vmem:[%s837 + $0x20] sm:$0xff]
  %v843 = vld [vmem:[%s837 + $0x28] sm:$0xff]
  %v844 = vld [vmem:[%s837 + $0x30] sm:$0xff]
  %v845 = vld [vmem:[%s837 + $0x38] sm:$0xff]
  %v846 = vld [vmem:[%s837 + $0x40] sm:$0xff]
  %v847 = vld [vmem:[%s837 + $0x48] sm:$0xff]
  %v848 = vld [vmem:[%s837 + $0x50] sm:$0xff]
  %v849 = vld [vmem:[%s837 + $0x58] sm:$0xff]
  %v850 = vld [vmem:[%s837 + $0x60] sm:$0xff]
  %v851 = vld [vmem:[%s837 + $0x68] sm:$0xff]
  %v852 = vld [vmem:[%s837 + $0x70] sm:$0xff]
  %v853 = vld [vmem:[%s837 + $0x78] sm:$0xff]
  %v854 = vld [vmem:[%s837 + $0x80] sm:$0xff]
  %v855 = vld [vmem:[%s837 + $0x88] sm:$0xff]
  %v856 = vld [vmem:[%s837 + $0x90] sm:$0xff]
  %v857 = vld [vmem:[%s837 + $0x98] sm:$0xff]
  %v858 = vld [vmem:[%s837 + $0xa0] sm:$0xff]
  %v859 = vld [vmem:[%s837 + $0xa8] sm:$0xff]
  %v860 = vld [vmem:[%s837 + $0xb0] sm:$0xff]
  %v861 = vld [vmem:[%s837 + $0xb8] sm:$0xff]
  %v862 = vld [vmem:[%s837 + $0xc0] sm:$0xff]
  %v863 = vld [vmem:[%s837 + $0xc8] sm:$0xff]
  %v864 = vld [vmem:[%s837 + $0xd0] sm:$0xff]
  %v865 = vld [vmem:[%s837 + $0xd8] sm:$0xff]
  %v866 = vrot.slane %v400, 2
  %v867 = vrot.slane %v401, 2
  %v897 = vunpack.c.l.b16 %v838
  %v898 = vunpack.c.h.b16 %v838
  %v899 = vunpack.c.l.b16 %v839
  %v900 = vunpack.c.h.b16 %v839
  %v901 = vunpack.c.l.b16 %v840
  %v902 = vunpack.c.h.b16 %v840
  %v903 = vunpack.c.l.b16 %v841
  %v904 = vunpack.c.h.b16 %v841
  %v905 = vunpack.c.l.b16 %v842
  %v906 = vunpack.c.h.b16 %v842
  %v907 = vunpack.c.l.b16 %v843
  %v908 = vunpack.c.h.b16 %v843
  %v909 = vunpack.c.l.b16 %v844
  %v910 = vunpack.c.h.b16 %v844
  %v911 = vunpack.c.l.b16 %v845
  %v912 = vunpack.c.h.b16 %v845
  %v913 = vunpack.c.l.b16 %v846
  %v914 = vunpack.c.h.b16 %v846
  %v915 = vunpack.c.l.b16 %v847
  %v916 = vunpack.c.h.b16 %v847
  %v917 = vunpack.c.l.b16 %v848
  %v918 = vunpack.c.h.b16 %v848
  %v919 = vunpack.c.l.b16 %v849
  %v920 = vunpack.c.h.b16 %v849
  %v921 = vunpack.c.l.b16 %v850
  %v922 = vunpack.c.h.b16 %v850
  %v923 = vunpack.c.l.b16 %v851
  %v924 = vunpack.c.h.b16 %v851
  %v925 = vunpack.c.l.b16 %v852
  %v926 = vunpack.c.h.b16 %v852
  %v927 = vunpack.c.l.b16 %v853
  %v928 = vunpack.c.h.b16 %v853
  %v929 = vunpack.c.l.b16 %v854
  %v930 = vunpack.c.h.b16 %v854
  %v931 = vunpack.c.l.b16 %v855
  %v932 = vunpack.c.h.b16 %v855
  %v933 = vunpack.c.l.b16 %v856
  %v934 = vunpack.c.h.b16 %v856
  %v935 = vunpack.c.l.b16 %v857
  %v936 = vunpack.c.h.b16 %v857
  %v937 = vunpack.c.l.b16 %v858
  %v938 = vunpack.c.h.b16 %v858
  %v939 = vunpack.c.l.b16 %v859
  %v940 = vunpack.c.h.b16 %v859
  %v941 = vunpack.c.l.b16 %v860
  %v942 = vunpack.c.h.b16 %v860
  %v943 = vunpack.c.l.b16 %v861
  %v944 = vunpack.c.h.b16 %v861
  %v945 = vunpack.c.l.b16 %v862
  %v946 = vunpack.c.h.b16 %v862
  %v947 = vunpack.c.l.b16 %v863
  %v948 = vunpack.c.h.b16 %v863
  %v949 = vunpack.c.l.b16 %v864
  %v950 = vunpack.c.h.b16 %v864
  %v951 = vunpack.c.l.b16 %v865
  %v952 = vunpack.c.h.b16 %v865
  %v953 = vpack.c.b16 %v899, %v897
  %v954 = vpack.c.b16 %v900, %v898
  %v955 = vpack.c.b16 %v903, %v901
  %v956 = vpack.c.b16 %v904, %v902
  %v957 = vpack.c.b16 %v907, %v905
  %v958 = vpack.c.b16 %v908, %v906
  %v959 = vpack.c.b16 %v911, %v909
  %v960 = vpack.c.b16 %v912, %v910
  %v961 = vpack.c.b16 %v915, %v913
  %v962 = vpack.c.b16 %v916, %v914
  %v963 = vpack.c.b16 %v919, %v917
  %v964 = vpack.c.b16 %v920, %v918
  %v965 = vpack.c.b16 %v923, %v921
  %v966 = vpack.c.b16 %v924, %v922
  %v967 = vpack.c.b16 %v927, %v925
  %v968 = vpack.c.b16 %v928, %v926
  %v969 = vpack.c.b16 %v931, %v929
  %v970 = vpack.c.b16 %v932, %v930
  %v971 = vpack.c.b16 %v935, %v933
  %v972 = vpack.c.b16 %v936, %v934
  %v973 = vpack.c.b16 %v939, %v937
  %v974 = vpack.c.b16 %v940, %v938
  %v975 = vpack.c.b16 %v943, %v941
  %v976 = vpack.c.b16 %v944, %v942
  %v977 = vpack.c.b16 %v947, %v945
  %v978 = vpack.c.b16 %v948, %v946
  %v979 = vpack.c.b16 %v951, %v949
  %v980 = vpack.c.b16 %v952, %v950
  %v1010 = vsel %vm604, %v867, 0
  %1012 = vmatprep.subr.bf16.mxu0 %v968
  %1013 = vmatpush1.bf16.msra.mxu0 %v967
  %1014 = vmatprep.subr.bf16.mxu0 %v966
  %1015 = vmatpush1.bf16.msra.mxu0 %v965
  %1016 = vmatprep.subr.bf16.mxu0 %v964
  %1017 = vmatpush1.bf16.msra.mxu0 %v963
  %1018 = vmatprep.subr.bf16.mxu0 %v962
  %1019 = vmatpush1.bf16.msra.mxu0 %v961
  %1020 = vmatprep.subr.bf16.mxu0 %v960
  %1021 = vmatpush1.bf16.msra.mxu0 %v959
  %1022 = vmatprep.subr.bf16.mxu0 %v958
  %1023 = vmatpush1.bf16.msra.mxu0 %v957
  %1024 = vmatprep.subr.bf16.mxu0 %v956
  %1025 = vmatpush1.bf16.msra.mxu0 %v955
  %1026 = vmatprep.subr.bf16.mxu0 %v954
  %1027 = vmatpush1.bf16.msra.mxu0 %v953
  %1028 = vmatprep.subr.bf16.mxu0 0
  %1029 = vmatpush2.bf16.msra.mxu0 0
  %1030 = vmatprep.subr.bf16.mxu0 0
  %1031 = vmatpush2.bf16.msra.mxu0 0
  %1032 = vmatprep.subr.bf16.mxu0 %v980
  %1033 = vmatpush2.bf16.msra.mxu0 %v979
  %1034 = vmatprep.subr.bf16.mxu0 %v978
  %1035 = vmatpush2.bf16.msra.mxu0 %v977
  %1036 = vmatprep.subr.bf16.mxu0 %v976
  %1037 = vmatpush2.bf16.msra.mxu0 %v975
  %1038 = vmatprep.subr.bf16.mxu0 %v974
  %1039 = vmatpush2.bf16.msra.mxu0 %v973
  %1040 = vmatprep.subr.bf16.mxu0 %v972
  %1041 = vmatpush2.bf16.msra.mxu0 %v971
  %1042 = vmatprep.subr.bf16.mxu0 %v970
  %1043 = vmatpush2.bf16.msra.mxu0 %v969
  %1044 = vmatprep.mubr.bf16.mxu0 %v1010
  %1045 = vmatmul.mubr.bf16.gmra.mxu0 %v866
  %v1046 = vpop.f32.mrf.mxu0
  %v1047 = vadd.f32 0.0, %v1046
  %v1048 = vpop.f32.mrf.mxu0
  %v1049 = vadd.f32 0.0, %v1048
  %v1050 = vpop.f32.mrf.mxu0
  %v1051 = vadd.f32 0.0, %v1050
  %v1052 = vpop.f32.mrf.mxu0
  %v1053 = vadd.f32 0.0, %v1052
  %1054 = vdwg.mxu0
  %v1055 = vadd.f32 %v829, %v1047
  %v1056 = vadd.f32 %v831, %v1049
  %v1057 = vadd.f32 %v833, %v1051
  %v1058 = vadd.f32 %v835, %v1053
  %v1059 = vld [vmem:[%s5] sm:$0x3]
  %v1061 = vlaneseq
  %v1062 = vshrl.u32 %v1061, 7
  %v1063 = vsub.s32 0, %v1062
  %v1064 = vrot.slane %v1059, %v1063
  %v1065 = vlaneseq
  %v1066 = vshrl.u32 %v1065, 7
  %v1067 = vsub.s32 1, %v1066
  %v1068 = vrot.slane %v1059, %v1067
  %v1071 = vadd.f32 %v1055, %v1064
  %v1072 = vadd.f32 %v1056, %v1068
  %v1073 = vadd.f32 %v1057, %v1064
  %v1074 = vadd.f32 %v1058, %v1068
  %v1075 = vmax.f32 %v1071, 0.0
  %v1076 = vmax.f32 %v1072, 0.0
  %v1077 = vmax.f32 %v1073, 0.0
  %v1078 = vmax.f32 %v1074, 0.0
  %v1079 = vpack.c.bf16 %v1077, %v1075
  %v1080 = vpack.c.bf16 %v1078, %v1076
  %v1081 = vld [vmem:[%s6] sm:$0xf]
  %v1082 = vld [vmem:[%s6 + $0x4] sm:$0xf]
  %v1083 = vld [vmem:[%s6 + $0x8] sm:$0xf]
  %v1084 = vld [vmem:[%s6 + $0xc] sm:$0xf]
  %v1085 = vld [vmem:[%s6 + $0x10] sm:$0xf]
  %v1086 = vld [vmem:[%s6 + $0x14] sm:$0xf]
  %v1087 = vld [vmem:[%s6 + $0x18] sm:$0xf]
  %v1088 = vld [vmem:[%s6 + $0x1c] sm:$0xf]
  %v1089 = vld [vmem:[%s6 + $0x20] sm:$0xf]
  %v1090 = vld [vmem:[%s6 + $0x24] sm:$0xf]
  %v1091 = vld [vmem:[%s6 + $0x28] sm:$0xf]
  %v1092 = vld [vmem:[%s6 + $0x2c] sm:$0xf]
  %v1093 = vld [vmem:[%s6 + $0x30] sm:$0xf]
  %v1094 = vld [vmem:[%s6 + $0x34] sm:$0xf]
  %v1095 = vld [vmem:[%s6 + $0x38] sm:$0xf]
  %v1096 = vld [vmem:[%s6 + $0x3c] sm:$0xf]
  %v1097 = vld [vmem:[%s6 + $0x40] sm:$0xf]
  %v1098 = vld [vmem:[%s6 + $0x44] sm:$0xf]
  %v1099 = vld [vmem:[%s6 + $0x48] sm:$0xf]
  %v1100 = vld [vmem:[%s6 + $0x4c] sm:$0xf]
  %s1101 = scalar_lea.vmem %s6, 80
  %v1102 = vld [vmem:[%s1101] sm:$0xf]
  %v1103 = vld [vmem:[%s1101 + $0x4] sm:$0xf]
  %v1104 = vld [vmem:[%s1101 + $0x8] sm:$0xf]
  %v1105 = vld [vmem:[%s1101 + $0xc] sm:$0xf]
  %v1106 = vld [vmem:[%s1101 + $0x10] sm:$0xf]
  %v1107 = vld [vmem:[%s1101 + $0x14] sm:$0xf]
  %v1108 = vld [vmem:[%s1101 + $0x18] sm:$0xf]
  %v1109 = vld [vmem:[%s1101 + $0x1c] sm:$0xf]
  %v1110 = vld [vmem:[%s1101 + $0x20] sm:$0xf]
  %v1111 = vld [vmem:[%s1101 + $0x24] sm:$0xf]
  %v1112 = vld [vmem:[%s1101 + $0x28] sm:$0xf]
  %v1113 = vld [vmem:[%s1101 + $0x2c] sm:$0xf]
  %v1114 = vld [vmem:[%s1101 + $0x30] sm:$0xf]
  %v1115 = vld [vmem:[%s1101 + $0x34] sm:$0xf]
  %v1116 = vld [vmem:[%s1101 + $0x38] sm:$0xf]
  %v1117 = vld [vmem:[%s1101 + $0x3c] sm:$0xf]
  %v1118 = vld [vmem:[%s1101 + $0x40] sm:$0xf]
  %v1119 = vld [vmem:[%s1101 + $0x44] sm:$0xf]
  %v1120 = vld [vmem:[%s1101 + $0x48] sm:$0xf]
  %v1121 = vld [vmem:[%s1101 + $0x4c] sm:$0xf]
  %v1124 = vrot.slane %v1079, 1
  %v1125 = vrot.slane %v1080, 1
  %v1147 = vunpack.c.l.b16 %v1102
  %v1148 = vunpack.c.l.b16 %v1103
  %v1149 = vunpack.c.l.b16 %v1104
  %v1150 = vunpack.c.l.b16 %v1105
  %v1151 = vunpack.c.l.b16 %v1106
  %v1152 = vunpack.c.l.b16 %v1107
  %v1153 = vunpack.c.l.b16 %v1108
  %v1154 = vunpack.c.l.b16 %v1109
  %v1155 = vunpack.c.l.b16 %v1110
  %v1156 = vunpack.c.l.b16 %v1111
  %v1157 = vunpack.c.l.b16 %v1112
  %v1158 = vunpack.c.l.b16 %v1113
  %v1159 = vunpack.c.l.b16 %v1114
  %v1160 = vunpack.c.l.b16 %v1115
  %v1161 = vunpack.c.l.b16 %v1116
  %v1162 = vunpack.c.l.b16 %v1117
  %v1163 = vunpack.c.l.b16 %v1118
  %v1164 = vunpack.c.l.b16 %v1119
  %v1165 = vunpack.c.l.b16 %v1120
  %v1166 = vunpack.c.l.b16 %v1121
  %v1167 = vpack.c.b16 %v1148, %v1147
  %v1168 = vpack.c.b16 %v1150, %v1149
  %v1169 = vpack.c.b16 %v1152, %v1151
  %v1170 = vpack.c.b16 %v1154, %v1153
  %v1171 = vpack.c.b16 %v1156, %v1155
  %v1172 = vpack.c.b16 %v1158, %v1157
  %v1173 = vpack.c.b16 %v1160, %v1159
  %v1174 = vpack.c.b16 %v1162, %v1161
  %v1175 = vpack.c.b16 %v1164, %v1163
  %v1176 = vpack.c.b16 %v1166, %v1165
  %vm1187 = vcmask 261120
  %v1189 = vsel %vm1187, %v1125, 0
  %1191 = vmatprep.subr.bf16.mxu0 0
  %1192 = vmatpush1.bf16.msra.mxu0 %v1174
  %1193 = vmatprep.subr.bf16.mxu0 0
  %1194 = vmatpush1.bf16.msra.mxu0 %v1173
  %1195 = vmatprep.subr.bf16.mxu0 0
  %1196 = vmatpush1.bf16.msra.mxu0 %v1172
  %1197 = vmatprep.subr.bf16.mxu0 0
  %1198 = vmatpush1.bf16.msra.mxu0 %v1171
  %1199 = vmatprep.subr.bf16.mxu0 0
  %1200 = vmatpush1.bf16.msra.mxu0 %v1170
  %1201 = vmatprep.subr.bf16.mxu0 0
  %1202 = vmatpush1.bf16.msra.mxu0 %v1169
  %1203 = vmatprep.subr.bf16.mxu0 0
  %1204 = vmatpush1.bf16.msra.mxu0 %v1168
  %1205 = vmatprep.subr.bf16.mxu0 0
  %1206 = vmatpush1.bf16.msra.mxu0 %v1167
  %1207 = vmatprep.subr.bf16.mxu0 0
  %1208 = vmatpush2.bf16.msra.mxu0 0
  %1209 = vmatprep.subr.bf16.mxu0 0
  %1210 = vmatpush2.bf16.msra.mxu0 0
  %1211 = vmatprep.subr.bf16.mxu0 0
  %1212 = vmatpush2.bf16.msra.mxu0 0
  %1213 = vmatprep.subr.bf16.mxu0 0
  %1214 = vmatpush2.bf16.msra.mxu0 0
  %1215 = vmatprep.subr.bf16.mxu0 0
  %1216 = vmatpush2.bf16.msra.mxu0 0
  %1217 = vmatprep.subr.bf16.mxu0 0
  %1218 = vmatpush2.bf16.msra.mxu0 0
  %1219 = vmatprep.subr.bf16.mxu0 0
  %1220 = vmatpush2.bf16.msra.mxu0 %v1176
  %1221 = vmatprep.subr.bf16.mxu0 0
  %1222 = vmatpush2.bf16.msra.mxu0 %v1175
  %1223 = vmatprep.mubr.bf16.mxu0 %v1189
  %1224 = vmatmul.mubr.bf16.gmra.mxu0 %v1124
  %v1225 = vpop.f32.mrf.mxu0
  %v1226 = vadd.f32 0.0, %v1225
  %v1227 = vpop.f32.mrf.mxu0
  %v1228 = vpop.f32.mrf.mxu0
  %v1229 = vpop.f32.mrf.mxu0
  %1230 = vdwg.mxu0
  %v1251 = vunpack.c.l.b16 %v1081
  %v1252 = vunpack.c.l.b16 %v1082
  %v1253 = vunpack.c.l.b16 %v1083
  %v1254 = vunpack.c.l.b16 %v1084
  %v1255 = vunpack.c.l.b16 %v1085
  %v1256 = vunpack.c.l.b16 %v1086
  %v1257 = vunpack.c.l.b16 %v1087
  %v1258 = vunpack.c.l.b16 %v1088
  %v1259 = vunpack.c.l.b16 %v1089
  %v1260 = vunpack.c.l.b16 %v1090
  %v1261 = vunpack.c.l.b16 %v1091
  %v1262 = vunpack.c.l.b16 %v1092
  %v1263 = vunpack.c.l.b16 %v1093
  %v1264 = vunpack.c.l.b16 %v1094
  %v1265 = vunpack.c.l.b16 %v1095
  %v1266 = vunpack.c.l.b16 %v1096
  %v1267 = vunpack.c.l.b16 %v1097
  %v1268 = vunpack.c.l.b16 %v1098
  %v1269 = vunpack.c.l.b16 %v1099
  %v1270 = vunpack.c.l.b16 %v1100
  %v1271 = vpack.c.b16 %v1252, %v1251
  %v1272 = vpack.c.b16 %v1254, %v1253
  %v1273 = vpack.c.b16 %v1256, %v1255
  %v1274 = vpack.c.b16 %v1258, %v1257
  %v1275 = vpack.c.b16 %v1260, %v1259
  %v1276 = vpack.c.b16 %v1262, %v1261
  %v1277 = vpack.c.b16 %v1264, %v1263
  %v1278 = vpack.c.b16 %v1266, %v1265
  %v1279 = vpack.c.b16 %v1268, %v1267
  %v1280 = vpack.c.b16 %v1270, %v1269
  %v1292 = vsel %vm1187, %v1080, 0
  %1294 = vmatprep.subr.bf16.mxu0 0
  %1295 = vmatpush1.bf16.msra.mxu0 %v1278
  %1296 = vmatprep.subr.bf16.mxu0 0
  %1297 = vmatpush1.bf16.msra.mxu0 %v1277
  %1298 = vmatprep.subr.bf16.mxu0 0
  %1299 = vmatpush1.bf16.msra.mxu0 %v1276
  %1300 = vmatprep.subr.bf16.mxu0 0
  %1301 = vmatpush1.bf16.msra.mxu0 %v1275
  %1302 = vmatprep.subr.bf16.mxu0 0
  %1303 = vmatpush1.bf16.msra.mxu0 %v1274
  %1304 = vmatprep.subr.bf16.mxu0 0
  %1305 = vmatpush1.bf16.msra.mxu0 %v1273
  %1306 = vmatprep.subr.bf16.mxu0 0
  %1307 = vmatpush1.bf16.msra.mxu0 %v1272
  %1308 = vmatprep.subr.bf16.mxu0 0
  %1309 = vmatpush1.bf16.msra.mxu0 %v1271
  %1310 = vmatprep.subr.bf16.mxu0 0
  %1311 = vmatpush2.bf16.msra.mxu0 0
  %1312 = vmatprep.subr.bf16.mxu0 0
  %1313 = vmatpush2.bf16.msra.mxu0 0
  %1314 = vmatprep.subr.bf16.mxu0 0
  %1315 = vmatpush2.bf16.msra.mxu0 0
  %1316 = vmatprep.subr.bf16.mxu0 0
  %1317 = vmatpush2.bf16.msra.mxu0 0
  %1318 = vmatprep.subr.bf16.mxu0 0
  %1319 = vmatpush2.bf16.msra.mxu0 0
  %1320 = vmatprep.subr.bf16.mxu0 0
  %1321 = vmatpush2.bf16.msra.mxu0 0
  %1322 = vmatprep.subr.bf16.mxu0 0
  %1323 = vmatpush2.bf16.msra.mxu0 %v1280
  %1324 = vmatprep.subr.bf16.mxu0 0
  %1325 = vmatpush2.bf16.msra.mxu0 %v1279
  %1326 = vmatprep.mubr.bf16.mxu0 %v1292
  %1327 = vmatmul.mubr.bf16.gmra.mxu0 %v1079
  %v1328 = vpop.f32.mrf.mxu0
  %v1329 = vadd.f32 %v1226, %v1328
  %v1330 = vpop.f32.mrf.mxu0
  %v1331 = vpop.f32.mrf.mxu0
  %v1332 = vpop.f32.mrf.mxu0
  %1333 = vdwg.mxu0
  %s1334 = scalar_lea.vmem %s6, 160
  %v1335 = vld [vmem:[%s1334] sm:$0xf]
  %v1336 = vld [vmem:[%s1334 + $0x4] sm:$0xf]
  %v1337 = vld [vmem:[%s1334 + $0x8] sm:$0xf]
  %v1338 = vld [vmem:[%s1334 + $0xc] sm:$0xf]
  %v1339 = vld [vmem:[%s1334 + $0x10] sm:$0xf]
  %v1340 = vld [vmem:[%s1334 + $0x14] sm:$0xf]
  %v1341 = vld [vmem:[%s1334 + $0x18] sm:$0xf]
  %v1342 = vld [vmem:[%s1334 + $0x1c] sm:$0xf]
  %v1343 = vld [vmem:[%s1334 + $0x20] sm:$0xf]
  %v1344 = vld [vmem:[%s1334 + $0x24] sm:$0xf]
  %v1345 = vld [vmem:[%s1334 + $0x28] sm:$0xf]
  %v1346 = vld [vmem:[%s1334 + $0x2c] sm:$0xf]
  %v1347 = vld [vmem:[%s1334 + $0x30] sm:$0xf]
  %v1348 = vld [vmem:[%s1334 + $0x34] sm:$0xf]
  %v1349 = vld [vmem:[%s1334 + $0x38] sm:$0xf]
  %v1350 = vld [vmem:[%s1334 + $0x3c] sm:$0xf]
  %v1351 = vld [vmem:[%s1334 + $0x40] sm:$0xf]
  %v1352 = vld [vmem:[%s1334 + $0x44] sm:$0xf]
  %v1353 = vld [vmem:[%s1334 + $0x48] sm:$0xf]
  %v1354 = vld [vmem:[%s1334 + $0x4c] sm:$0xf]
  %v1355 = vrot.slane %v1079, 2
  %v1356 = vrot.slane %v1080, 2
  %v1378 = vunpack.c.l.b16 %v1335
  %v1379 = vunpack.c.l.b16 %v1336
  %v1380 = vunpack.c.l.b16 %v1337
  %v1381 = vunpack.c.l.b16 %v1338
  %v1382 = vunpack.c.l.b16 %v1339
  %v1383 = vunpack.c.l.b16 %v1340
  %v1384 = vunpack.c.l.b16 %v1341
  %v1385 = vunpack.c.l.b16 %v1342
  %v1386 = vunpack.c.l.b16 %v1343
  %v1387 = vunpack.c.l.b16 %v1344
  %v1388 = vunpack.c.l.b16 %v1345
  %v1389 = vunpack.c.l.b16 %v1346
  %v1390 = vunpack.c.l.b16 %v1347
  %v1391 = vunpack.c.l.b16 %v1348
  %v1392 = vunpack.c.l.b16 %v1349
  %v1393 = vunpack.c.l.b16 %v1350
  %v1394 = vunpack.c.l.b16 %v1351
  %v1395 = vunpack.c.l.b16 %v1352
  %v1396 = vunpack.c.l.b16 %v1353
  %v1397 = vunpack.c.l.b16 %v1354
  %v1398 = vpack.c.b16 %v1379, %v1378
  %v1399 = vpack.c.b16 %v1381, %v1380
  %v1400 = vpack.c.b16 %v1383, %v1382
  %v1401 = vpack.c.b16 %v1385, %v1384
  %v1402 = vpack.c.b16 %v1387, %v1386
  %v1403 = vpack.c.b16 %v1389, %v1388
  %v1404 = vpack.c.b16 %v1391, %v1390
  %v1405 = vpack.c.b16 %v1393, %v1392
  %v1406 = vpack.c.b16 %v1395, %v1394
  %v1407 = vpack.c.b16 %v1397, %v1396
  %v1419 = vsel %vm1187, %v1356, 0
  %1421 = vmatprep.subr.bf16.mxu0 0
  %1422 = vmatpush1.bf16.msra.mxu0 %v1405
  %1423 = vmatprep.subr.bf16.mxu0 0
  %1424 = vmatpush1.bf16.msra.mxu0 %v1404
  %1425 = vmatprep.subr.bf16.mxu0 0
  %1426 = vmatpush1.bf16.msra.mxu0 %v1403
  %1427 = vmatprep.subr.bf16.mxu0 0
  %1428 = vmatpush1.bf16.msra.mxu0 %v1402
  %1429 = vmatprep.subr.bf16.mxu0 0
  %1430 = vmatpush1.bf16.msra.mxu0 %v1401
  %1431 = vmatprep.subr.bf16.mxu0 0
  %1432 = vmatpush1.bf16.msra.mxu0 %v1400
  %1433 = vmatprep.subr.bf16.mxu0 0
  %1434 = vmatpush1.bf16.msra.mxu0 %v1399
  %1435 = vmatprep.subr.bf16.mxu0 0
  %1436 = vmatpush1.bf16.msra.mxu0 %v1398
  %1437 = vmatprep.subr.bf16.mxu0 0
  %1438 = vmatpush2.bf16.msra.mxu0 0
  %1439 = vmatprep.subr.bf16.mxu0 0
  %1440 = vmatpush2.bf16.msra.mxu0 0
  %1441 = vmatprep.subr.bf16.mxu0 0
  %1442 = vmatpush2.bf16.msra.mxu0 0
  %1443 = vmatprep.subr.bf16.mxu0 0
  %1444 = vmatpush2.bf16.msra.mxu0 0
  %1445 = vmatprep.subr.bf16.mxu0 0
  %1446 = vmatpush2.bf16.msra.mxu0 0
  %1447 = vmatprep.subr.bf16.mxu0 0
  %1448 = vmatpush2.bf16.msra.mxu0 0
  %1449 = vmatprep.subr.bf16.mxu0 0
  %1450 = vmatpush2.bf16.msra.mxu0 %v1407
  %1451 = vmatprep.subr.bf16.mxu0 0
  %1452 = vmatpush2.bf16.msra.mxu0 %v1406
  %1453 = vmatprep.mubr.bf16.mxu0 %v1419
  %1454 = vmatmul.mubr.bf16.gmra.mxu0 %v1355
  %v1455 = vpop.f32.mrf.mxu0
  %v1456 = vadd.f32 0.0, %v1455
  %v1457 = vpop.f32.mrf.mxu0
  %v1458 = vpop.f32.mrf.mxu0
  %v1459 = vpop.f32.mrf.mxu0
  %1460 = vdwg.mxu0
  %v1461 = vadd.f32 %v1329, %v1456
  %v1462 = vld [vmem:[%s7] sm:$0x1]
  %v1464 = vlaneseq
  %v1465 = vshrl.u32 %v1464, 7
  %v1466 = vsub.s32 0, %v1465
  %v1467 = vrot.slane %v1462, %v1466
  %v1469 = vadd.f32 %v1461, %v1467
  %v1470 = vmax.f32 %v1469, 0.0
  %v1471 = vpack.c.bf16 %v1470, %v1470
  %v1472 = vld [vmem:[%s8] sm:$0xf]
  %v1473 = vld [vmem:[%s8 + $0x4] sm:$0xf]
  %v1474 = vld [vmem:[%s8 + $0x8] sm:$0xf]
  %v1475 = vld [vmem:[%s8 + $0xc] sm:$0xf]
  %v1476 = vld [vmem:[%s8 + $0x10] sm:$0xf]
  %v1477 = vld [vmem:[%s8 + $0x14] sm:$0xf]
  %v1478 = vld [vmem:[%s8 + $0x18] sm:$0xf]
  %v1479 = vld [vmem:[%s8 + $0x1c] sm:$0xf]
  %v1480 = vld [vmem:[%s8 + $0x20] sm:$0xf]
  %v1481 = vld [vmem:[%s8 + $0x24] sm:$0xf]
  %v1482 = vld [vmem:[%s8 + $0x28] sm:$0xf]
  %v1483 = vld [vmem:[%s8 + $0x2c] sm:$0xf]
  %s1484 = scalar_lea.vmem %s8, 48
  %v1485 = vld [vmem:[%s1484] sm:$0xf]
  %v1486 = vld [vmem:[%s1484 + $0x4] sm:$0xf]
  %v1487 = vld [vmem:[%s1484 + $0x8] sm:$0xf]
  %v1488 = vld [vmem:[%s1484 + $0xc] sm:$0xf]
  %v1489 = vld [vmem:[%s1484 + $0x10] sm:$0xf]
  %v1490 = vld [vmem:[%s1484 + $0x14] sm:$0xf]
  %v1491 = vld [vmem:[%s1484 + $0x18] sm:$0xf]
  %v1492 = vld [vmem:[%s1484 + $0x1c] sm:$0xf]
  %v1493 = vld [vmem:[%s1484 + $0x20] sm:$0xf]
  %v1494 = vld [vmem:[%s1484 + $0x24] sm:$0xf]
  %v1495 = vld [vmem:[%s1484 + $0x28] sm:$0xf]
  %v1496 = vld [vmem:[%s1484 + $0x2c] sm:$0xf]
  %v1498 = vrot.slane %v1471, 1
  %v1511 = vunpack.c.l.b16 %v1485
  %v1512 = vunpack.c.l.b16 %v1486
  %v1513 = vunpack.c.l.b16 %v1487
  %v1514 = vunpack.c.l.b16 %v1488
  %v1515 = vunpack.c.l.b16 %v1489
  %v1516 = vunpack.c.l.b16 %v1490
  %v1517 = vunpack.c.l.b16 %v1491
  %v1518 = vunpack.c.l.b16 %v1492
  %v1519 = vunpack.c.l.b16 %v1493
  %v1520 = vunpack.c.l.b16 %v1494
  %v1521 = vunpack.c.l.b16 %v1495
  %v1522 = vunpack.c.l.b16 %v1496
  %v1523 = vpack.c.b16 %v1512, %v1511
  %v1524 = vpack.c.b16 %v1514, %v1513
  %v1525 = vpack.c.b16 %v1516, %v1515
  %v1526 = vpack.c.b16 %v1518, %v1517
  %v1527 = vpack.c.b16 %v1520, %v1519
  %v1528 = vpack.c.b16 %v1522, %v1521
  %v1536 = vsel %vm604, %v1498, 0
  %1538 = vmatprep.subr.bf16.mxu0 0
  %1539 = vmatpush1.bf16.msra.mxu0 0
  %1540 = vmatprep.subr.bf16.mxu0 0
  %1541 = vmatpush1.bf16.msra.mxu0 0
  %1542 = vmatprep.subr.bf16.mxu0 0
  %1543 = vmatpush1.bf16.msra.mxu0 %v1528
  %1544 = vmatprep.subr.bf16.mxu0 0
  %1545 = vmatpush1.bf16.msra.mxu0 %v1527
  %1546 = vmatprep.subr.bf16.mxu0 0
  %1547 = vmatpush1.bf16.msra.mxu0 %v1526
  %1548 = vmatprep.subr.bf16.mxu0 0
  %1549 = vmatpush1.bf16.msra.mxu0 %v1525
  %1550 = vmatprep.subr.bf16.mxu0 0
  %1551 = vmatpush1.bf16.msra.mxu0 %v1524
  %1552 = vmatprep.subr.bf16.mxu0 0
  %1553 = vmatpush1.bf16.msra.mxu0 %v1523
  %1554 = vmatprep.subr.bf16.mxu0 0
  %1555 = vmatpush2.bf16.msra.mxu0 0
  %1556 = vmatprep.subr.bf16.mxu0 0
  %1557 = vmatpush2.bf16.msra.mxu0 0
  %1558 = vmatprep.subr.bf16.mxu0 0
  %1559 = vmatpush2.bf16.msra.mxu0 0
  %1560 = vmatprep.subr.bf16.mxu0 0
  %1561 = vmatpush2.bf16.msra.mxu0 0
  %1562 = vmatprep.subr.bf16.mxu0 0
  %1563 = vmatpush2.bf16.msra.mxu0 0
  %1564 = vmatprep.subr.bf16.mxu0 0
  %1565 = vmatpush2.bf16.msra.mxu0 0
  %1566 = vmatprep.subr.bf16.mxu0 0
  %1567 = vmatpush2.bf16.msra.mxu0 0
  %1568 = vmatprep.subr.bf16.mxu0 0
  %1569 = vmatpush2.bf16.msra.mxu0 0
  %1570 = vmatprep.mubr.bf16.mxu0 0
  %1571 = vmatmul.mubr.bf16.gmra.mxu0 %v1536
  %v1572 = vpop.f32.mrf.mxu0
  %v1573 = vadd.f32 0.0, %v1572
  %v1574 = vpop.f32.mrf.mxu0
  %v1575 = vpop.f32.mrf.mxu0
  %v1576 = vpop.f32.mrf.mxu0
  %1577 = vdwg.mxu0
  %v1590 = vunpack.c.l.b16 %v1472
  %v1591 = vunpack.c.l.b16 %v1473
  %v1592 = vunpack.c.l.b16 %v1474
  %v1593 = vunpack.c.l.b16 %v1475
  %v1594 = vunpack.c.l.b16 %v1476
  %v1595 = vunpack.c.l.b16 %v1477
  %v1596 = vunpack.c.l.b16 %v1478
  %v1597 = vunpack.c.l.b16 %v1479
  %v1598 = vunpack.c.l.b16 %v1480
  %v1599 = vunpack.c.l.b16 %v1481
  %v1600 = vunpack.c.l.b16 %v1482
  %v1601 = vunpack.c.l.b16 %v1483
  %v1602 = vpack.c.b16 %v1591, %v1590
  %v1603 = vpack.c.b16 %v1593, %v1592
  %v1604 = vpack.c.b16 %v1595, %v1594
  %v1605 = vpack.c.b16 %v1597, %v1596
  %v1606 = vpack.c.b16 %v1599, %v1598
  %v1607 = vpack.c.b16 %v1601, %v1600
  %v1615 = vsel %vm604, %v1471, 0
  %1617 = vmatprep.subr.bf16.mxu0 0
  %1618 = vmatpush1.bf16.msra.mxu0 0
  %1619 = vmatprep.subr.bf16.mxu0 0
  %1620 = vmatpush1.bf16.msra.mxu0 0
  %1621 = vmatprep.subr.bf16.mxu0 0
  %1622 = vmatpush1.bf16.msra.mxu0 %v1607
  %1623 = vmatprep.subr.bf16.mxu0 0
  %1624 = vmatpush1.bf16.msra.mxu0 %v1606
  %1625 = vmatprep.subr.bf16.mxu0 0
  %1626 = vmatpush1.bf16.msra.mxu0 %v1605
  %1627 = vmatprep.subr.bf16.mxu0 0
  %1628 = vmatpush1.bf16.msra.mxu0 %v1604
  %1629 = vmatprep.subr.bf16.mxu0 0
  %1630 = vmatpush1.bf16.msra.mxu0 %v1603
  %1631 = vmatprep.subr.bf16.mxu0 0
  %1632 = vmatpush1.bf16.msra.mxu0 %v1602
  %1633 = vmatprep.subr.bf16.mxu0 0
  %1634 = vmatpush2.bf16.msra.mxu0 0
  %1635 = vmatprep.subr.bf16.mxu0 0
  %1636 = vmatpush2.bf16.msra.mxu0 0
  %1637 = vmatprep.subr.bf16.mxu0 0
  %1638 = vmatpush2.bf16.msra.mxu0 0
  %1639 = vmatprep.subr.bf16.mxu0 0
  %1640 = vmatpush2.bf16.msra.mxu0 0
  %1641 = vmatprep.subr.bf16.mxu0 0
  %1642 = vmatpush2.bf16.msra.mxu0 0
  %1643 = vmatprep.subr.bf16.mxu0 0
  %1644 = vmatpush2.bf16.msra.mxu0 0
  %1645 = vmatprep.subr.bf16.mxu0 0
  %1646 = vmatpush2.bf16.msra.mxu0 0
  %1647 = vmatprep.subr.bf16.mxu0 0
  %1648 = vmatpush2.bf16.msra.mxu0 0
  %1649 = vmatprep.mubr.bf16.mxu0 0
  %1650 = vmatmul.mubr.bf16.gmra.mxu0 %v1615
  %v1651 = vpop.f32.mrf.mxu0
  %v1652 = vadd.f32 %v1573, %v1651
  %v1653 = vpop.f32.mrf.mxu0
  %v1654 = vpop.f32.mrf.mxu0
  %v1655 = vpop.f32.mrf.mxu0
  %1656 = vdwg.mxu0
  %s1657 = scalar_lea.vmem %s8, 96
  %v1658 = vld [vmem:[%s1657] sm:$0xf]
  %v1659 = vld [vmem:[%s1657 + $0x4] sm:$0xf]
  %v1660 = vld [vmem:[%s1657 + $0x8] sm:$0xf]
  %v1661 = vld [vmem:[%s1657 + $0xc] sm:$0xf]
  %v1662 = vld [vmem:[%s1657 + $0x10] sm:$0xf]
  %v1663 = vld [vmem:[%s1657 + $0x14] sm:$0xf]
  %v1664 = vld [vmem:[%s1657 + $0x18] sm:$0xf]
  %v1665 = vld [vmem:[%s1657 + $0x1c] sm:$0xf]
  %v1666 = vld [vmem:[%s1657 + $0x20] sm:$0xf]
  %v1667 = vld [vmem:[%s1657 + $0x24] sm:$0xf]
  %v1668 = vld [vmem:[%s1657 + $0x28] sm:$0xf]
  %v1669 = vld [vmem:[%s1657 + $0x2c] sm:$0xf]
  %v1670 = vrot.slane %v1471, 2
  %v1683 = vunpack.c.l.b16 %v1658
  %v1684 = vunpack.c.l.b16 %v1659
  %v1685 = vunpack.c.l.b16 %v1660
  %v1686 = vunpack.c.l.b16 %v1661
  %v1687 = vunpack.c.l.b16 %v1662
  %v1688 = vunpack.c.l.b16 %v1663
  %v1689 = vunpack.c.l.b16 %v1664
  %v1690 = vunpack.c.l.b16 %v1665
  %v1691 = vunpack.c.l.b16 %v1666
  %v1692 = vunpack.c.l.b16 %v1667
  %v1693 = vunpack.c.l.b16 %v1668
  %v1694 = vunpack.c.l.b16 %v1669
  %v1695 = vpack.c.b16 %v1684, %v1683
  %v1696 = vpack.c.b16 %v1686, %v1685
  %v1697 = vpack.c.b16 %v1688, %v1687
  %v1698 = vpack.c.b16 %v1690, %v1689
  %v1699 = vpack.c.b16 %v1692, %v1691
  %v1700 = vpack.c.b16 %v1694, %v1693
  %v1708 = vsel %vm604, %v1670, 0
  %1710 = vmatprep.subr.bf16.mxu0 0
  %1711 = vmatpush1.bf16.msra.mxu0 0
  %1712 = vmatprep.subr.bf16.mxu0 0
  %1713 = vmatpush1.bf16.msra.mxu0 0
  %1714 = vmatprep.subr.bf16.mxu0 0
  %1715 = vmatpush1.bf16.msra.mxu0 %v1700
  %1716 = vmatprep.subr.bf16.mxu0 0
  %1717 = vmatpush1.bf16.msra.mxu0 %v1699
  %1718 = vmatprep.subr.bf16.mxu0 0
  %1719 = vmatpush1.bf16.msra.mxu0 %v1698
  %1720 = vmatprep.subr.bf16.mxu0 0
  %1721 = vmatpush1.bf16.msra.mxu0 %v1697
  %1722 = vmatprep.subr.bf16.mxu0 0
  %1723 = vmatpush1.bf16.msra.mxu0 %v1696
  %1724 = vmatprep.subr.bf16.mxu0 0
  %1725 = vmatpush1.bf16.msra.mxu0 %v1695
  %1726 = vmatprep.subr.bf16.mxu0 0
  %1727 = vmatpush2.bf16.msra.mxu0 0
  %1728 = vmatprep.subr.bf16.mxu0 0
  %1729 = vmatpush2.bf16.msra.mxu0 0
  %1730 = vmatprep.subr.bf16.mxu0 0
  %1731 = vmatpush2.bf16.msra.mxu0 0
  %1732 = vmatprep.subr.bf16.mxu0 0
  %1733 = vmatpush2.bf16.msra.mxu0 0
  %1734 = vmatprep.subr.bf16.mxu0 0
  %1735 = vmatpush2.bf16.msra.mxu0 0
  %1736 = vmatprep.subr.bf16.mxu0 0
  %1737 = vmatpush2.bf16.msra.mxu0 0
  %1738 = vmatprep.subr.bf16.mxu0 0
  %1739 = vmatpush2.bf16.msra.mxu0 0
  %1740 = vmatprep.subr.bf16.mxu0 0
  %1741 = vmatpush2.bf16.msra.mxu0 0
  %1742 = vmatprep.mubr.bf16.mxu0 0
  %1743 = vmatmul.mubr.bf16.gmra.mxu0 %v1708
  %v1744 = vpop.f32.mrf.mxu0
  %v1745 = vadd.f32 0.0, %v1744
  %v1746 = vpop.f32.mrf.mxu0
  %v1747 = vpop.f32.mrf.mxu0
  %v1748 = vpop.f32.mrf.mxu0
  %1749 = vdwg.mxu0
  %v1750 = vadd.f32 %v1652, %v1745
  %v1751 = vld [vmem:[%s9] sm:$0x1]
  %v1753 = vlaneseq
  %v1754 = vshrl.u32 %v1753, 7
  %v1755 = vsub.s32 0, %v1754
  %v1756 = vrot.slane %v1751, %v1755
  %v1758 = vadd.f32 %v1750, %v1756
  %v1759 = vmax.f32 %v1758, 0.0
  %v1760 = vpack.c.bf16 %v1759, %v1759
  %v1761 = vld [vmem:[%s10] sm:$0xf]
  %v1762 = vld [vmem:[%s10 + $0x4] sm:$0xf]
  %v1763 = vld [vmem:[%s10 + $0x8] sm:$0xf]
  %v1764 = vld [vmem:[%s10 + $0xc] sm:$0xf]
  %v1765 = vld [vmem:[%s11] sm:$0x1]
  %v1767 = vlaneseq
  %v1768 = vshrl.u32 %v1767, 7
  %v1769 = vsub.s32 0, %v1768
  %v1770 = vrot.slane %v1765, %v1769
  %v1776 = vunpack.c.l.b16 %v1761
  %v1777 = vunpack.c.l.b16 %v1762
  %v1778 = vunpack.c.l.b16 %v1763
  %v1779 = vunpack.c.l.b16 %v1764
  %v1780 = vpack.c.b16 %v1777, %v1776
  %v1781 = vpack.c.b16 %v1779, %v1778
  %v1785 = vsel %vm1187, %v1760, 0
  %1787 = vmatprep.subr.bf16.mxu0 0
  %1788 = vmatpush1.bf16.msra.mxu0 0
  %1789 = vmatprep.subr.bf16.mxu0 0
  %1790 = vmatpush1.bf16.msra.mxu0 0
  %1791 = vmatprep.subr.bf16.mxu0 0
  %1792 = vmatpush1.bf16.msra.mxu0 0
  %1793 = vmatprep.subr.bf16.mxu0 0
  %1794 = vmatpush1.bf16.msra.mxu0 0
  %1795 = vmatprep.subr.bf16.mxu0 0
  %1796 = vmatpush1.bf16.msra.mxu0 0
  %1797 = vmatprep.subr.bf16.mxu0 0
  %1798 = vmatpush1.bf16.msra.mxu0 0
  %1799 = vmatprep.subr.bf16.mxu0 0
  %1800 = vmatpush1.bf16.msra.mxu0 %v1781
  %1801 = vmatprep.subr.bf16.mxu0 0
  %1802 = vmatpush1.bf16.msra.mxu0 %v1780
  %1803 = vmatprep.subr.bf16.mxu0 0
  %1804 = vmatpush2.bf16.msra.mxu0 0
  %1805 = vmatprep.subr.bf16.mxu0 0
  %1806 = vmatpush2.bf16.msra.mxu0 0
  %1807 = vmatprep.subr.bf16.mxu0 0
  %1808 = vmatpush2.bf16.msra.mxu0 0
  %1809 = vmatprep.subr.bf16.mxu0 0
  %1810 = vmatpush2.bf16.msra.mxu0 0
  %1811 = vmatprep.subr.bf16.mxu0 0
  %1812 = vmatpush2.bf16.msra.mxu0 0
  %1813 = vmatprep.subr.bf16.mxu0 0
  %1814 = vmatpush2.bf16.msra.mxu0 0
  %1815 = vmatprep.subr.bf16.mxu0 0
  %1816 = vmatpush2.bf16.msra.mxu0 0
  %1817 = vmatprep.subr.bf16.mxu0 0
  %1818 = vmatpush2.bf16.msra.mxu0 0
  %1819 = vmatprep.mubr.bf16.mxu0 0
  %1820 = vmatmul.mubr.bf16.gmra.mxu0 %v1785
  %v1821 = vpop.f32.mrf.mxu0
  %v1822 = vadd.f32 %v1770, %v1821
  %v1823 = vpop.f32.mrf.mxu0
  %v1824 = vpop.f32.mrf.mxu0
  %v1825 = vpop.f32.mrf.mxu0
  %1826 = vdwg.mxu0
  %vm1827 = vcmask 254976
  %v1828 = vsel %vm1827, %v1822, 0.0
  %1829 = vadd.xlane.f32.xlu0 %v1828
  %v1830 = vpop.xlane.xlu0 %1829
  %v1831 = vrcp.pop 32.0
  %v1832 = vmul.f32 %v1830, %v1831
  %v1833 = vsub.f32 %v1822, %v1832
  %v1834 = vmul.f32 %v1833, %v1833
  %v1835 = vsel %vm1827, %v1834, 0.0
  %1836 = vadd.xlane.f32.xlu0 %v1835
  %v1837 = vpop.xlane.xlu0 %1836
  %v1838 = vmul.f32 %v1837, %v1831
  %v1839 = vadd.f32 %v1838, 1e-05
  %v1840 = vrsqrt.pop %v1839
  %v1841 = vmul.f32 %v1833, %v1840
  %v1842 = vld [vmem:[%s12] sm:$0x1]
  %v1844 = vlaneseq
  %v1845 = vshrl.u32 %v1844, 7
  %v1846 = vsub.s32 0, %v1845
  %v1847 = vrot.slane %v1842, %v1846
  %v1849 = vmul.f32 %v1841, %v1847
  %v1850 = vld [vmem:[%s13] sm:$0x1]
  %v1852 = vlaneseq
  %v1853 = vshrl.u32 %v1852, 7
  %v1854 = vsub.s32 0, %v1853
  %v1855 = vrot.slane %v1850, %v1854
  %v1857 = vadd.f32 %v1849, %v1855
  %v1858 = vtanh.pop %v1857
  %v1859 = vld [vmem:[%s1] sm:$0x3]
  %v1860 = vpack.c.bf16 %v1859, %v1859
  %v1861 = vpack.c.bf16 %v1858, %v1858
  %v1862 = vld [vmem:[%s14] sm:$0xf]
  %v1863 = vld [vmem:[%s14 + $0x4] sm:$0xf]
  %v1864 = vld [vmem:[%s14 + $0x8] sm:$0xf]
  %v1865 = vld [vmem:[%s14 + $0xc] sm:$0xf]
  %v1866 = vld [vmem:[%s15] sm:$0x7]
  %vm1867 = vcmask 48128
  %v1869 = vsel %vm1867, %v1860, 0
  %vm1871 = vcmask 1042432
  %v1873 = vsel %vm1871, %v1866, 0
  %1875 = vmatprep.subr.bf16.mxu0 0
  %1876 = vmatpush1.bf16.msra.mxu0 0
  %1877 = vmatprep.subr.bf16.mxu0 0
  %1878 = vmatpush1.bf16.msra.mxu0 0
  %1879 = vmatprep.subr.bf16.mxu0 0
  %1880 = vmatpush1.bf16.msra.mxu0 0
  %1881 = vmatprep.subr.bf16.mxu0 0
  %1882 = vmatpush1.bf16.msra.mxu0 0
  %1883 = vmatprep.subr.bf16.mxu0 0
  %1884 = vmatpush1.bf16.msra.mxu0 0
  %1885 = vmatprep.subr.bf16.mxu0 0
  %1886 = vmatpush1.bf16.msra.mxu0 0
  %1887 = vmatprep.subr.bf16.mxu0 0
  %1888 = vmatpush1.bf16.msra.mxu0 0
  %1889 = vmatprep.subr.bf16.mxu0 0
  %1890 = vmatpush1.bf16.msra.mxu0 %v1873
  %1891 = vmatprep.subr.bf16.mxu0 0
  %1892 = vmatpush2.bf16.msra.mxu0 0
  %1893 = vmatprep.subr.bf16.mxu0 0
  %1894 = vmatpush2.bf16.msra.mxu0 0
  %1895 = vmatprep.subr.bf16.mxu0 0
  %1896 = vmatpush2.bf16.msra.mxu0 0
  %1897 = vmatprep.subr.bf16.mxu0 0
  %1898 = vmatpush2.bf16.msra.mxu0 0
  %1899 = vmatprep.subr.bf16.mxu0 0
  %1900 = vmatpush2.bf16.msra.mxu0 0
  %1901 = vmatprep.subr.bf16.mxu0 0
  %1902 = vmatpush2.bf16.msra.mxu0 0
  %1903 = vmatprep.subr.bf16.mxu0 0
  %1904 = vmatpush2.bf16.msra.mxu0 0
  %1905 = vmatprep.subr.bf16.mxu0 0
  %1906 = vmatpush2.bf16.msra.mxu0 0
  %1907 = vmatprep.mubr.bf16.mxu0 0
  %1908 = vmatmul.mubr.bf16.gmra.mxu0 %v1869
  %v1909 = vpop.f32.mrf.mxu0
  %v1910 = vadd.f32 0.0, %v1909
  %v1911 = vpop.f32.mrf.mxu0
  %v1912 = vpop.f32.mrf.mxu0
  %v1913 = vpop.f32.mrf.mxu0
  %1914 = vdwg.mxu0
  %v1919 = vunpack.c.l.b16 %v1862
  %v1920 = vunpack.c.l.b16 %v1863
  %v1921 = vunpack.c.l.b16 %v1864
  %v1922 = vunpack.c.l.b16 %v1865
  %v1923 = vpack.c.b16 %v1920, %v1919
  %v1924 = vpack.c.b16 %v1922, %v1921
  %v1928 = vsel %vm1187, %v1861, 0
  %1930 = vmatprep.subr.bf16.mxu0 0
  %1931 = vmatpush1.bf16.msra.mxu0 0
  %1932 = vmatprep.subr.bf16.mxu0 0
  %1933 = vmatpush1.bf16.msra.mxu0 0
  %1934 = vmatprep.subr.bf16.mxu0 0
  %1935 = vmatpush1.bf16.msra.mxu0 0
  %1936 = vmatprep.subr.bf16.mxu0 0
  %1937 = vmatpush1.bf16.msra.mxu0 0
  %1938 = vmatprep.subr.bf16.mxu0 0
  %1939 = vmatpush1.bf16.msra.mxu0 0
  %1940 = vmatprep.subr.bf16.mxu0 0
  %1941 = vmatpush1.bf16.msra.mxu0 0
  %1942 = vmatprep.subr.bf16.mxu0 0
  %1943 = vmatpush1.bf16.msra.mxu0 %v1924
  %1944 = vmatprep.subr.bf16.mxu0 0
  %1945 = vmatpush1.bf16.msra.mxu0 %v1923
  %1946 = vmatprep.subr.bf16.mxu0 0
  %1947 = vmatpush2.bf16.msra.mxu0 0
  %1948 = vmatprep.subr.bf16.mxu0 0
  %1949 = vmatpush2.bf16.msra.mxu0 0
  %1950 = vmatprep.subr.bf16.mxu0 0
  %1951 = vmatpush2.bf16.msra.mxu0 0
  %1952 = vmatprep.subr.bf16.mxu0 0
  %1953 = vmatpush2.bf16.msra.mxu0 0
  %1954 = vmatprep.subr.bf16.mxu0 0
  %1955 = vmatpush2.bf16.msra.mxu0 0
  %1956 = vmatprep.subr.bf16.mxu0 0
  %1957 = vmatpush2.bf16.msra.mxu0 0
  %1958 = vmatprep.subr.bf16.mxu0 0
  %1959 = vmatpush2.bf16.msra.mxu0 0
  %1960 = vmatprep.subr.bf16.mxu0 0
  %1961 = vmatpush2.bf16.msra.mxu0 0
  %1962 = vmatprep.mubr.bf16.mxu0 0
  %1963 = vmatmul.mubr.bf16.gmra.mxu0 %v1928
  %v1964 = vpop.f32.mrf.mxu0
  %v1965 = vadd.f32 %v1910, %v1964
  %v1966 = vpop.f32.mrf.mxu0
  %v1967 = vpop.f32.mrf.mxu0
  %v1968 = vpop.f32.mrf.mxu0
  %1969 = vdwg.mxu0
  %v1970 = vld [vmem:[%s16] sm:$0x1]
  %v1972 = vlaneseq
  %v1973 = vshrl.u32 %v1972, 7
  %v1974 = vsub.s32 0, %v1973
  %v1975 = vrot.slane %v1970, %v1974
  %v1977 = vadd.f32 %v1965, %v1975
  %v1978 = vmax.f32 %v1977, 0.0
  %v1979 = vpack.c.bf16 %v1978, %v1978
  %v1980 = vld [vmem:[%s17] sm:$0xf]
  %v1981 = vld [vmem:[%s17 + $0x4] sm:$0xf]
  %v1982 = vld [vmem:[%s17 + $0x8] sm:$0xf]
  %v1983 = vld [vmem:[%s17 + $0xc] sm:$0xf]
  %v1984 = vld [vmem:[%s17 + $0x10] sm:$0xf]
  %v1985 = vld [vmem:[%s17 + $0x14] sm:$0xf]
  %v1986 = vld [vmem:[%s17 + $0x18] sm:$0xf]
  %v1987 = vld [vmem:[%s17 + $0x1c] sm:$0xf]
  %v1988 = vld [vmem:[%s18] sm:$0x1]
  %v1990 = vlaneseq
  %v1991 = vshrl.u32 %v1990, 7
  %v1992 = vsub.s32 0, %v1991
  %v1993 = vrot.slane %v1988, %v1992
  %v2003 = vunpack.c.l.b16 %v1980
  %v2004 = vunpack.c.l.b16 %v1981
  %v2005 = vunpack.c.l.b16 %v1982
  %v2006 = vunpack.c.l.b16 %v1983
  %v2007 = vunpack.c.l.b16 %v1984
  %v2008 = vunpack.c.l.b16 %v1985
  %v2009 = vunpack.c.l.b16 %v1986
  %v2010 = vunpack.c.l.b16 %v1987
  %v2011 = vpack.c.b16 %v2004, %v2003
  %v2012 = vpack.c.b16 %v2006, %v2005
  %v2013 = vpack.c.b16 %v2008, %v2007
  %v2014 = vpack.c.b16 %v2010, %v2009
  %v2020 = vsel %vm135, %v1979, 0
  %2022 = vmatprep.subr.bf16.mxu0 0
  %2023 = vmatpush1.bf16.msra.mxu0 0
  %2024 = vmatprep.subr.bf16.mxu0 0
  %2025 = vmatpush1.bf16.msra.mxu0 0
  %2026 = vmatprep.subr.bf16.mxu0 0
  %2027 = vmatpush1.bf16.msra.mxu0 0
  %2028 = vmatprep.subr.bf16.mxu0 0
  %2029 = vmatpush1.bf16.msra.mxu0 0
  %2030 = vmatprep.subr.bf16.mxu0 0
  %2031 = vmatpush1.bf16.msra.mxu0 %v2014
  %2032 = vmatprep.subr.bf16.mxu0 0
  %2033 = vmatpush1.bf16.msra.mxu0 %v2013
  %2034 = vmatprep.subr.bf16.mxu0 0
  %2035 = vmatpush1.bf16.msra.mxu0 %v2012
  %2036 = vmatprep.subr.bf16.mxu0 0
  %2037 = vmatpush1.bf16.msra.mxu0 %v2011
  %2038 = vmatprep.subr.bf16.mxu0 0
  %2039 = vmatpush2.bf16.msra.mxu0 0
  %2040 = vmatprep.subr.bf16.mxu0 0
  %2041 = vmatpush2.bf16.msra.mxu0 0
  %2042 = vmatprep.subr.bf16.mxu0 0
  %2043 = vmatpush2.bf16.msra.mxu0 0
  %2044 = vmatprep.subr.bf16.mxu0 0
  %2045 = vmatpush2.bf16.msra.mxu0 0
  %2046 = vmatprep.subr.bf16.mxu0 0
  %2047 = vmatpush2.bf16.msra.mxu0 0
  %2048 = vmatprep.subr.bf16.mxu0 0
  %2049 = vmatpush2.bf16.msra.mxu0 0
  %2050 = vmatprep.subr.bf16.mxu0 0
  %2051 = vmatpush2.bf16.msra.mxu0 0
  %2052 = vmatprep.subr.bf16.mxu0 0
  %2053 = vmatpush2.bf16.msra.mxu0 0
  %2054 = vmatprep.mubr.bf16.mxu0 0
  %2055 = vmatmul.mubr.bf16.gmra.mxu0 %v2020
  %v2056 = vpop.f32.mrf.mxu0
  %v2057 = vadd.f32 %v1993, %v2056
  %v2058 = vpop.f32.mrf.mxu0
  %v2059 = vpop.f32.mrf.mxu0
  %v2060 = vpop.f32.mrf.mxu0
  %2061 = vdwg.mxu0
  %v2062 = vmax.f32 %v2057, 0.0
  %v2063 = vpack.c.bf16 %v2062, %v2062
  %v2064 = vld [vmem:[%s19] sm:$0xf]
  %v2065 = vld [vmem:[%s19 + $0x4] sm:$0xf]
  %v2066 = vld [vmem:[%s19 + $0x8] sm:$0xf]
  %v2067 = vld [vmem:[%s19 + $0xc] sm:$0xf]
  %v2068 = vld [vmem:[%s19 + $0x10] sm:$0xf]
  %v2069 = vld [vmem:[%s19 + $0x14] sm:$0xf]
  %v2070 = vld [vmem:[%s19 + $0x18] sm:$0xf]
  %v2071 = vld [vmem:[%s19 + $0x1c] sm:$0xf]
  %v2072 = vld [vmem:[%s20] sm:$0x1]
  %v2074 = vlaneseq
  %v2075 = vshrl.u32 %v2074, 7
  %v2076 = vsub.s32 0, %v2075
  %v2077 = vrot.slane %v2072, %v2076
  %v2087 = vunpack.c.l.b16 %v2064
  %v2088 = vunpack.c.l.b16 %v2065
  %v2089 = vunpack.c.l.b16 %v2066
  %v2090 = vunpack.c.l.b16 %v2067
  %v2091 = vunpack.c.l.b16 %v2068
  %v2092 = vunpack.c.l.b16 %v2069
  %v2093 = vunpack.c.l.b16 %v2070
  %v2094 = vunpack.c.l.b16 %v2071
  %v2095 = vpack.c.b16 %v2088, %v2087
  %v2096 = vpack.c.b16 %v2090, %v2089
  %v2097 = vpack.c.b16 %v2092, %v2091
  %v2098 = vpack.c.b16 %v2094, %v2093
  %v2104 = vsel %vm135, %v2063, 0
  %2106 = vmatprep.subr.bf16.mxu0 0
  %2107 = vmatpush1.bf16.msra.mxu0 0
  %2108 = vmatprep.subr.bf16.mxu0 0
  %2109 = vmatpush1.bf16.msra.mxu0 0
  %2110 = vmatprep.subr.bf16.mxu0 0
  %2111 = vmatpush1.bf16.msra.mxu0 0
  %2112 = vmatprep.subr.bf16.mxu0 0
  %2113 = vmatpush1.bf16.msra.mxu0 0
  %2114 = vmatprep.subr.bf16.mxu0 0
  %2115 = vmatpush1.bf16.msra.mxu0 %v2098
  %2116 = vmatprep.subr.bf16.mxu0 0
  %2117 = vmatpush1.bf16.msra.mxu0 %v2097
  %2118 = vmatprep.subr.bf16.mxu0 0
  %2119 = vmatpush1.bf16.msra.mxu0 %v2096
  %2120 = vmatprep.subr.bf16.mxu0 0
  %2121 = vmatpush1.bf16.msra.mxu0 %v2095
  %2122 = vmatprep.subr.bf16.mxu0 0
  %2123 = vmatpush2.bf16.msra.mxu0 0
  %2124 = vmatprep.subr.bf16.mxu0 0
  %2125 = vmatpush2.bf16.msra.mxu0 0
  %2126 = vmatprep.subr.bf16.mxu0 0
  %2127 = vmatpush2.bf16.msra.mxu0 0
  %2128 = vmatprep.subr.bf16.mxu0 0
  %2129 = vmatpush2.bf16.msra.mxu0 0
  %2130 = vmatprep.subr.bf16.mxu0 0
  %2131 = vmatpush2.bf16.msra.mxu0 0
  %2132 = vmatprep.subr.bf16.mxu0 0
  %2133 = vmatpush2.bf16.msra.mxu0 0
  %2134 = vmatprep.subr.bf16.mxu0 0
  %2135 = vmatpush2.bf16.msra.mxu0 0
  %2136 = vmatprep.subr.bf16.mxu0 0
  %2137 = vmatpush2.bf16.msra.mxu0 0
  %2138 = vmatprep.mubr.bf16.mxu0 0
  %2139 = vmatmul.mubr.bf16.gmra.mxu0 %v2104
  %v2140 = vpop.f32.mrf.mxu0
  %v2141 = vadd.f32 %v2077, %v2140
  %v2142 = vpop.f32.mrf.mxu0
  %v2143 = vpop.f32.mrf.mxu0
  %v2144 = vpop.f32.mrf.mxu0
  %2145 = vdwg.mxu0
  %vm2146 = vcmask 9216
  %2147 = vst.msk [vmem:[%s21] sm:$0x3] %vm2146, %v2141
  // Predicated region
  $region86: #{critic_forward.1} parent=0 // pred_check
    _
  $region87: #{critic_forward.1} parent=0 // pred_check_branch
    %2149 = sbr.rel (0) target = $region89
  $region88: #{critic_forward.1} parent=0 // pred_region
    _
  $region89: #{critic_forward.1} parent=0 // pred_fallthru
    _
  // Predicated region
  $region90: #{critic_forward.1} parent=0 // pred_check
    _
  $region91: #{critic_forward.1} parent=0 // pred_check_branch
    %2151 = sbr.rel (0) target = $region93
  $region92: #{critic_forward.1} parent=0 // pred_region
    _
  $region93: #{critic_forward.1} parent=0 // pred_fallthru
    _

</llo_original>
